<compile_context>
chip_gen: v7x
topology: tpu7x:2x2x1
jax: 0.10.0
libtpu: 0.0.40
codegen_flags: <defaults>
</compile_context>

<pallas_src>
import jax
import jax.numpy as jnp
from jax import lax
from jax.experimental import pallas as pl
from jax.experimental.pallas import tpu as pltpu


def _round_up(v, m):
    return ((v + m - 1) // m) * m


def _pick_tile_h(H, W, max_m=1024):
    """Largest divisor TH of H with TH*W <= max_m and TH*W a multiple of 8."""
    if H * W <= max_m:
        return H
    for th in range(H - 1, 0, -1):
        if H % th == 0 and th * W <= max_m and (th * W) % 8 == 0:
            return th
    # TODO(synk): W-tiling fallback for very wide rows; full-height tile for now.
    return H


def _vmem_limit_bytes():
    """~75% of physical VMEM (48 MiB on v7x, 96 MiB on v5e/v6e), with fallback."""
    try:
        cap = int(pltpu.get_tpu_info().vmem_capacity_bytes)
    except Exception:
        cap = 128 * 1024 * 1024
    return int(min((cap * 3) // 4, 96 * 1024 * 1024))


def conv3x3_kernel(x_ref, w_ref, b_ref, o_ref, col_ref):
    # x_ref  : (1, TH+2, W+2, Cin_p)   halo band for this (n, h) tile
    # w_ref  : (K_p, Cout_p)           folded HWIO weight slab (resident)
    # b_ref  : (1, Cout_p)             bias, f32
    # o_ref  : (1, M, Cout_p)          flat output tile, M = TH*W, Cout_p % 128 == 0
    # col_ref: (M, K_p)                im2col scratch, K_p % 128 == 0
    TH = x_ref.shape[1] - 2
    W = x_ref.shape[2] - 2
    Cin_p = x_ref.shape[3]
    M, K_p = col_ref.shape
    K = 9 * Cin_p

    # im2col: 9 static halo windows, concatenated along the lane axis and
    # zero-padded to K_p, written with a single full-width (unmasked) store.
    pieces = []
    for dy in range(3):
        for dx in range(3):
            patch = x_ref[0, dy:dy + TH, dx:dx + W, :]
            pieces.append(patch.reshape(M, Cin_p).astype(col_ref.dtype))
    if K_p > K:
        pieces.append(jnp.zeros((M, K_p - K), dtype=col_ref.dtype))
    col_ref[...] = jnp.concatenate(pieces, axis=-1)

    # Single MXU matmul: (M, K_p) @ (K_p, Cout_p), f32 accumulation.
    acc = jnp.dot(col_ref[...], w_ref[...], preferred_element_type=jnp.float32)
    acc = acc + b_ref[...]
    o_ref[0] = acc.astype(o_ref.dtype)


def conv3x3_forward(x_nchw, weight_oihw, bias, *, compute_dtype=None):
    """x_nchw: (N, Cin, H, W); weight_oihw: (Cout, Cin, 3, 3); bias: (Cout,)."""
    N, Cin, H, W = x_nchw.shape
    Cout = weight_oihw.shape[0]
    out_dtype = x_nchw.dtype
    if compute_dtype is None:
        compute_dtype = x_nchw.dtype

    Cin_p = _round_up(Cin, 8)          # sublane-friendly channel pad
    Cout_p = _round_up(Cout, 128)      # lane-dense output channels
    K = 9 * Cin_p
    K_p = _round_up(K, 128)            # lane-aligned contraction
    TH = _pick_tile_h(H, W)
    n_h = H // TH
    M = TH * W

    # Glue: NCHW->NHWC, fused spatial halo + channel pad, cast to compute dtype.
    x_nhwc = jnp.transpose(x_nchw, (0, 2, 3, 1))
    x_pad = jnp.pad(x_nhwc, ((0, 0), (1, 1), (1, 1), (0, Cin_p - Cin)))
    x_pad = x_pad.astype(compute_dtype)

    # Halo bands: (N*n_h, TH+2, W+2, Cin_p).  Keeps the per-step input block
    # small (and auto double-buffered) regardless of image height.
    if n_h == 1:
        x_bands = x_pad
    else:
        x_bands = jnp.stack(
            [x_pad[:, h * TH:h * TH + TH + 2] for h in range(n_h)], axis=1
        ).reshape(N * n_h, TH + 2, W + 2, Cin_p)

    # Weights: OIHW -> HWIO -> pad channels -> fold taps -> pad K to K_p.
    w = jnp.transpose(weight_oihw, (2, 3, 1, 0))                     # (3,3,Cin,Cout)
    w = jnp.pad(w, ((0, 0), (0, 0), (0, Cin_p - Cin), (0, Cout_p - Cout)))
    w = w.reshape(K, Cout_p)
    w = jnp.pad(w, ((0, K_p - K), (0, 0))).astype(compute_dtype)     # (K_p, Cout_p)
    b = jnp.pad(bias, (0, Cout_p - Cout)).reshape(1, Cout_p).astype(jnp.float32)

    out_flat = pl.pallas_call(
        conv3x3_kernel,
        out_shape=jax.ShapeDtypeStruct((N * n_h, M, Cout_p), out_dtype),
        grid_spec=pltpu.PrefetchScalarGridSpec(
            num_scalar_prefetch=0,
            grid=(N, n_h),
            in_specs=[
                # One halo band per grid step.
                pl.BlockSpec((1, TH + 2, W + 2, Cin_p),
                             lambda n, h: (n * n_h + h, 0, 0, 0)),
                # Weight slab + bias: constant block index -> stay resident.
                pl.BlockSpec((K_p, Cout_p), lambda n, h: (0, 0)),
                pl.BlockSpec((1, Cout_p), lambda n, h: (0, 0)),
            ],
            out_specs=pl.BlockSpec((1, M, Cout_p),
                                   lambda n, h: (n * n_h + h, 0, 0)),
            scratch_shapes=[pltpu.VMEM((M, K_p), compute_dtype)],
        ),
        compiler_params=pltpu.CompilerParams(
            dimension_semantics=("parallel", "parallel"),
            vmem_limit_bytes=_vmem_limit_bytes(),
        ),
    )(x_bands, w, b)

    # Metadata-only reshape back to NHWC, strip Cout padding, return NCHW.
    out_nhwc = out_flat.reshape(N, H, W, Cout_p)[..., :Cout]
    return jnp.transpose(out_nhwc, (0, 3, 1, 2))


if __name__ == "__main__":
    key = jax.random.PRNGKey(0)
    k_x, k_w, k_b = jax.random.split(key, 3)

    N, Cin, Cout, H, W = 2, 4, 8, 16, 16

    x = jax.random.normal(k_x, (N, Cin, H, W), dtype=jnp.float32)
    weight = jax.random.normal(k_w, (Cout, Cin, 3, 3), dtype=jnp.float32) * 0.1
    bias = jax.random.normal(k_b, (Cout,), dtype=jnp.float32) * 0.1

    # Reference: XLA conv (NCHW, zero pad 1, stride 1) + bias.
    ref = lax.conv_general_dilated(
        x, weight, window_strides=(1, 1), padding=((1, 1), (1, 1)),
        dimension_numbers=("NCHW", "OIHW", "NCHW"),
    ) + bias[None, :, None, None]

    # f32 path (exactness check).
    out = jax.block_until_ready(conv3x3_forward(x, weight, bias))
    assert out.shape == (N, Cout, H, W)
    assert jnp.allclose(out, ref, atol=1e-4, rtol=1e-4)

    # bf16 MXU path (v6e/v7x): bf16 operands, f32 accumulation.
    out_bf16 = jax.block_until_ready(
        conv3x3_forward(x, weight, bias, compute_dtype=jnp.bfloat16))
    assert out_bf16.shape == (N, Cout, H, W)
    assert jnp.allclose(out_bf16, ref, atol=5e-2, rtol=5e-2)

    print("KERNEL_OK")
</pallas_src>

<mosaic_0001>
module attributes {stable_mosaic.version = 11 : i64} {
  func.func @conv3x3_kernel(%arg0: i32, %arg1: i32, %arg2: memref<1x18x18x8xf32, #tpu.memory_space<vmem>>, %arg3: memref<128x128xf32, #tpu.memory_space<vmem>>, %arg4: memref<1x128xf32, #tpu.memory_space<vmem>>, %arg5: memref<1x256x128xf32, #tpu.memory_space<vmem>>, %arg6: memref<256x128xf32, #tpu.memory_space<vmem>>) attributes {dimension_semantics = [#tpu.dimension_semantics<parallel>, #tpu.dimension_semantics<parallel>], iteration_bounds = array<i64: 2, 1>, scalar_prefetch = 0 : i64, scratch_operands = 1 : i64, tpu.core_type = #tpu.core_type<tc>, window_params = [{transform_indices = @transform_0, window_bounds = array<i64: 1, 18, 18, 8>}, {pipeline_mode = #tpu.pipeline_mode<synchronous>, transform_indices = @transform_1, window_bounds = array<i64: 128, 128>}, {pipeline_mode = #tpu.pipeline_mode<synchronous>, transform_indices = @transform_2, window_bounds = array<i64: 1, 128>}, {transform_indices = @transform_3, window_bounds = array<i64: 1, 256, 128>}]} {
    %c0 = arith.constant 0 : index
    %c0_0 = arith.constant 0 : index
    %c0_1 = arith.constant 0 : index
    %c0_2 = arith.constant 0 : index
    %0 = vector.load %arg2[%c0, %c0_0, %c0_1, %c0_2] : memref<1x18x18x8xf32, #tpu.memory_space<vmem>>, vector<1x16x16x8xf32>
    %1 = vector.shape_cast %0 : vector<1x16x16x8xf32> to vector<16x16x8xf32>
    %2 = vector.shape_cast %1 : vector<16x16x8xf32> to vector<256x8xf32>
    %c0_3 = arith.constant 0 : index
    %c0_4 = arith.constant 0 : index
    %c1 = arith.constant 1 : index
    %c0_5 = arith.constant 0 : index
    %3 = vector.load %arg2[%c0_3, %c0_4, %c1, %c0_5] : memref<1x18x18x8xf32, #tpu.memory_space<vmem>>, vector<1x16x16x8xf32>
    %4 = vector.shape_cast %3 : vector<1x16x16x8xf32> to vector<16x16x8xf32>
    %5 = vector.shape_cast %4 : vector<16x16x8xf32> to vector<256x8xf32>
    %c0_6 = arith.constant 0 : index
    %c0_7 = arith.constant 0 : index
    %c2 = arith.constant 2 : index
    %c0_8 = arith.constant 0 : index
    %6 = vector.load %arg2[%c0_6, %c0_7, %c2, %c0_8] : memref<1x18x18x8xf32, #tpu.memory_space<vmem>>, vector<1x16x16x8xf32>
    %7 = vector.shape_cast %6 : vector<1x16x16x8xf32> to vector<16x16x8xf32>
    %8 = vector.shape_cast %7 : vector<16x16x8xf32> to vector<256x8xf32>
    %c0_9 = arith.constant 0 : index
    %c1_10 = arith.constant 1 : index
    %c0_11 = arith.constant 0 : index
    %c0_12 = arith.constant 0 : index
    %9 = vector.load %arg2[%c0_9, %c1_10, %c0_11, %c0_12] : memref<1x18x18x8xf32, #tpu.memory_space<vmem>>, vector<1x16x16x8xf32>
    %10 = vector.shape_cast %9 : vector<1x16x16x8xf32> to vector<16x16x8xf32>
    %11 = vector.shape_cast %10 : vector<16x16x8xf32> to vector<256x8xf32>
    %c0_13 = arith.constant 0 : index
    %c1_14 = arith.constant 1 : index
    %c1_15 = arith.constant 1 : index
    %c0_16 = arith.constant 0 : index
    %12 = vector.load %arg2[%c0_13, %c1_14, %c1_15, %c0_16] : memref<1x18x18x8xf32, #tpu.memory_space<vmem>>, vector<1x16x16x8xf32>
    %13 = vector.shape_cast %12 : vector<1x16x16x8xf32> to vector<16x16x8xf32>
    %14 = vector.shape_cast %13 : vector<16x16x8xf32> to vector<256x8xf32>
    %c0_17 = arith.constant 0 : index
    %c1_18 = arith.constant 1 : index
    %c2_19 = arith.constant 2 : index
    %c0_20 = arith.constant 0 : index
    %15 = vector.load %arg2[%c0_17, %c1_18, %c2_19, %c0_20] : memref<1x18x18x8xf32, #tpu.memory_space<vmem>>, vector<1x16x16x8xf32>
    %16 = vector.shape_cast %15 : vector<1x16x16x8xf32> to vector<16x16x8xf32>
    %17 = vector.shape_cast %16 : vector<16x16x8xf32> to vector<256x8xf32>
    %c0_21 = arith.constant 0 : index
    %c2_22 = arith.constant 2 : index
    %c0_23 = arith.constant 0 : index
    %c0_24 = arith.constant 0 : index
    %18 = vector.load %arg2[%c0_21, %c2_22, %c0_23, %c0_24] : memref<1x18x18x8xf32, #tpu.memory_space<vmem>>, vector<1x16x16x8xf32>
    %19 = vector.shape_cast %18 : vector<1x16x16x8xf32> to vector<16x16x8xf32>
    %20 = vector.shape_cast %19 : vector<16x16x8xf32> to vector<256x8xf32>
    %c0_25 = arith.constant 0 : index
    %c2_26 = arith.constant 2 : index
    %c1_27 = arith.constant 1 : index
    %c0_28 = arith.constant 0 : index
    %21 = vector.load %arg2[%c0_25, %c2_26, %c1_27, %c0_28] : memref<1x18x18x8xf32, #tpu.memory_space<vmem>>, vector<1x16x16x8xf32>
    %22 = vector.shape_cast %21 : vector<1x16x16x8xf32> to vector<16x16x8xf32>
    %23 = vector.shape_cast %22 : vector<16x16x8xf32> to vector<256x8xf32>
    %c0_29 = arith.constant 0 : index
    %c2_30 = arith.constant 2 : index
    %c2_31 = arith.constant 2 : index
    %c0_32 = arith.constant 0 : index
    %24 = vector.load %arg2[%c0_29, %c2_30, %c2_31, %c0_32] : memref<1x18x18x8xf32, #tpu.memory_space<vmem>>, vector<1x16x16x8xf32>
    %25 = vector.shape_cast %24 : vector<1x16x16x8xf32> to vector<16x16x8xf32>
    %26 = vector.shape_cast %25 : vector<16x16x8xf32> to vector<256x8xf32>
    %cst = arith.constant 0.000000e+00 : f32
    %27 = vector.broadcast %cst : f32 to vector<256x56xf32>
    %28 = tpu.concatenate %2, %5, %8, %11, %14, %17, %20, %23, %26, %27 in 1 : vector<256x8xf32>, vector<256x8xf32>, vector<256x8xf32>, vector<256x8xf32>, vector<256x8xf32>, vector<256x8xf32>, vector<256x8xf32>, vector<256x8xf32>, vector<256x8xf32>, vector<256x56xf32> -> vector<256x128xf32>
    %c0_33 = arith.constant 0 : index
    %c0_34 = arith.constant 0 : index
    %29 = vector.load %arg6[%c0_33, %c0_34] : memref<256x128xf32, #tpu.memory_space<vmem>>, vector<256x128xf32>
    tpu.vector_store %arg6[%c0_33, %c0_34], %28 {strides = array<i32>} : memref<256x128xf32, #tpu.memory_space<vmem>>, vector<256x128xf32>,
    %c0_35 = arith.constant 0 : index
    %c0_36 = arith.constant 0 : index
    %30 = vector.load %arg6[%c0_35, %c0_36] : memref<256x128xf32, #tpu.memory_space<vmem>>, vector<256x128xf32>
    %c0_37 = arith.constant 0 : index
    %c0_38 = arith.constant 0 : index
    %31 = vector.load %arg3[%c0_37, %c0_38] : memref<128x128xf32, #tpu.memory_space<vmem>>, vector<128x128xf32>
    %cst_39 = arith.constant dense<0.000000e+00> : vector<256x128xf32>
    %32 = tpu.matmul %30, %31, %cst_39 {dimension_numbers = #tpu.dot_dimension_numbers<[1], [0], [0], [1], [0, 0, 1, 1], [], []>} : vector<256x128xf32>, vector<128x128xf32>, vector<256x128xf32> -> vector<256x128xf32>
    %c0_40 = arith.constant 0 : index
    %c0_41 = arith.constant 0 : index
    %33 = vector.load %arg4[%c0_40, %c0_41] : memref<1x128xf32, #tpu.memory_space<vmem>>, vector<1x128xf32>
    %34 = vector.broadcast %33 : vector<1x128xf32> to vector<256x128xf32>
    %35 = arith.addf %32, %34 : vector<256x128xf32>
    %c0_42 = arith.constant 0 : index
    %c0_43 = arith.constant 0 : index
    %c0_44 = arith.constant 0 : index
    %36 = vector.load %arg5[%c0_42, %c0_43, %c0_44] : memref<1x256x128xf32, #tpu.memory_space<vmem>>, vector<1x256x128xf32>
    %37 = vector.shape_cast %36 : vector<1x256x128xf32> to vector<256x128xf32>
    %38 = vector.shape_cast %35 : vector<256x128xf32> to vector<1x256x128xf32>
    tpu.vector_store %arg5[%c0_42, %c0_43, %c0_44], %38 {strides = array<i32>} : memref<1x256x128xf32, #tpu.memory_space<vmem>>, vector<1x256x128xf32>,
    return
  }
  func.func @transform_0(%arg0: i32, %arg1: i32) -> (i32, i32, i32, i32) {
    %c1_i32 = arith.constant 1 : i32
    %0 = arith.muli %arg0, %c1_i32 : i32
    %1 = arith.addi %0, %arg1 : i32
    %c0_i32 = arith.constant 0 : i32
    %c0_i32_0 = arith.constant 0 : i32
    %c0_i32_1 = arith.constant 0 : i32
    %c0_i32_2 = arith.constant 0 : i32
    return %1, %c0_i32, %c0_i32_0, %c0_i32_1 : i32, i32, i32, i32
  }
  func.func @transform_1(%arg0: i32, %arg1: i32) -> (i32, i32) {
    %c0_i32 = arith.constant 0 : i32
    %c0_i32_0 = arith.constant 0 : i32
    %c0_i32_1 = arith.constant 0 : i32
    return %c0_i32, %c0_i32_0 : i32, i32
  }
  func.func @transform_2(%arg0: i32, %arg1: i32) -> (i32, i32) {
    %c0_i32 = arith.constant 0 : i32
    %c0_i32_0 = arith.constant 0 : i32
    %c0_i32_1 = arith.constant 0 : i32
    return %c0_i32, %c0_i32_0 : i32, i32
  }
  func.func @transform_3(%arg0: i32, %arg1: i32) -> (i32, i32, i32) {
    %c1_i32 = arith.constant 1 : i32
    %0 = arith.muli %arg0, %c1_i32 : i32
    %1 = arith.addi %0, %arg1 : i32
    %c0_i32 = arith.constant 0 : i32
    %c0_i32_0 = arith.constant 0 : i32
    %c0_i32_1 = arith.constant 0 : i32
    return %1, %c0_i32, %c0_i32_0 : i32, i32, i32
  }
}

</mosaic_0001>

<llo_original>
// kernel: tpu_custom_call.1
$region0: #{tpu_custom_call.1}
  #allocation0 [shape = 'u32[]', space=smem, size = 0x4, offset = 0x4, fixed_abs, tag = 'smem constant byte address 0x4 - core index']
  #allocation1 [shape = 'u32[144,128]{1,0:T(1,128)}', space=vmem, size = 0x12000, scoped, tag = 'internal scratch']
  #allocation2 [shape = 'f32[256,128]{1,0:T(8,128)}', space=vmem, size = 0x20000, scoped, tag = 'scratch operand']
  %s0 = inlined_call_operand.hbm [shape: f32[2,18,18,8], index: 0, kind: input, shape index: {}]
  %s1 = inlined_call_operand.hbm [shape: f32[128,128], index: 1, kind: input, shape index: {}]
  %s2 = inlined_call_operand.hbm [shape: f32[1,128], index: 2, kind: input, shape index: {}]
  %s3 = inlined_call_operand.hbm [shape: f32[2,256,128], index: 3, kind: output, shape index: {}]
  %s4 = sld [smem:[#allocation0]]
  $region57: #{tpu_custom_call.1} parent=0
    _
  %s6 = ssub.s32 1, %s4
  %s7 = scalar_select 0, %s6, %s4
  $region1: #{tpu_custom_call.1} parent=0
    #allocation3 [shape = 'u8[442368]{0}', space=vmem, size = 0x6c000, scoped, tag = 'input window, operand 0']
    #allocation4 [shape = 's32[2]{0}', space=sflag, size = 0x8, scoped, tag = 'scoped memory for tpu_custom_call.1']
    #allocation5 [shape = 's32[2]{0}', space=sflag, size = 0x8, scoped, tag = 'scoped memory for tpu_custom_call.1']
    #allocation6 [shape = 'u8[65536]{0}', space=vmem, size = 0x10000, scoped, tag = 'input window, operand 1, single buffered']
    #allocation7 [shape = 's32[1]{0}', space=sflag, size = 0x4, scoped, tag = 'scoped memory for tpu_custom_call.1']
    #allocation8 [shape = 'u8[512]{0}', space=vmem, size = 0x400, scoped, tag = 'input window, operand 2, single buffered']
    #allocation9 [shape = 'u8[262144]{0}', space=vmem, size = 0x40000, scoped, tag = 'output window, operand 0']
    %8 = vsyncpa [#allocation4], 0
    %s9 = scalar_lea.sflag [#allocation4], 1
    %10 = vsyncpa %s9, 0
    %11 = vsyncpa [#allocation7], 0
    %12 = vsyncpa [#allocation5], 0
    %s13 = scalar_lea.sflag [#allocation5], 1
    %14 = vsyncpa %s13, 0
    loop: start=0, step=1, limit=4
    $region2: #{tpu_custom_call.1} parent=1 // loop_pre_header
      _
    $region3: #{tpu_custom_call.1} parent=1 // loop_header
      %s16 = sphi 0, %s20
      %p17 = scmp.ge.s32.totalorder %s16, 4
      %s23 = sphi 0, %s35
      %s24 = sphi 0, %s31
      %s25 = sphi 0, %s23
      %s26 = sphi 0, %s24
      %s27 = sphi 0, %s25
      %s28 = sphi 0, %s26
      %s40 = sphi 0, %s42
      %s43 = sphi 0, %s40
      %s44 = sphi 0, %s43
      %s60 = sphi 0, %s44
      %s64 = sphi 0, %s64
      %s66 = sphi 0, %s64
      %s67 = sphi 0, %s66
      %s81 = sphi 0, %s67
      %s85 = sphi 0, %s85
      %s87 = sphi 0, %s85
      %s88 = sphi 0, %s87
      %s102 = sphi 0, %s88
      %s110 = sphi 0, %s112
      %s113 = sphi 0, %s110
      %s114 = sphi 0, %s113
      %s130 = sphi 0, %s114
    $region4: #{tpu_custom_call.1} parent=1 // loop_header_branch
      %19 = sbr.rel (%p17) target = $region8
    $region5: #{tpu_custom_call.1} parent=1 // loop_body
      %s21 = ssub.s32 %s16, 1
      %s22 = ssub.s32 %s16, 2
      %s29 = sadd.s32 1, %s24
      %p30 = scmp.ge.s32.totalorder %s29, 1
      %s31 = scalar_select %p30, 0, %s29
      %s32 = sadd.s32 1, %s23
      %s33 = scalar_select %p30, %s32, %s23
      %p34 = scmp.ge.s32.totalorder %s33, 2
      %s35 = scalar_select %p34, 0, %s33
      %s36 = sadd.s32 %s23, %s24
      %s37 = sadd.s32 %s35, %s31
      %s38 = ssub.s32 %s36, %s37
      %p39 = scmp.eq.s32.totalorder %s38, 0
      %s41 = sadd.s32 %s40, 1
      %s42 = scalar_select %p39, %s40, %s41
      %p45 = pneg %p39
      %p46 = scmp.eq.s32.totalorder %s16, 1
      %p47 = por %p45, %p46
      %p48 = scmp.ne.s32.totalorder %s40, %s43
      %p49 = scmp.eq.s32.totalorder %s16, 0
      %p50 = por %p48, %p49
      %p51 = scmp.ne.s32.totalorder %s40, %s43
      %p52 = scmp.eq.s32.totalorder %s21, 1
      %p53 = por %p51, %p52
      %p54 = scmp.ne.s32.totalorder %s43, %s44
      %p55 = scmp.eq.s32.totalorder %s21, 0
      %p56 = por %p54, %p55
      %p57 = scmp.ne.s32.totalorder %s43, %s44
      %p58 = scmp.eq.s32.totalorder %s22, 1
      %p59 = por %p57, %p58
      %p61 = scmp.ne.s32.totalorder %s44, %s60
      %p62 = scmp.eq.s32.totalorder %s22, 0
      %p63 = por %p61, %p62
      %s65 = sadd.s32 %s64, 1
      %p68 = scmp.eq.s32.totalorder %s16, 1
      %p69 = scmp.ne.s32.totalorder %s64, %s66
      %p70 = scmp.eq.s32.totalorder %s16, 0
      %p71 = por %p69, %p70
      %p72 = scmp.ne.s32.totalorder %s64, %s66
      %p73 = scmp.eq.s32.totalorder %s21, 1
      %p74 = por %p72, %p73
      %p75 = scmp.ne.s32.totalorder %s66, %s67
      %p76 = scmp.eq.s32.totalorder %s21, 0
      %p77 = por %p75, %p76
      %p78 = scmp.ne.s32.totalorder %s66, %s67
      %p79 = scmp.eq.s32.totalorder %s22, 1
      %p80 = por %p78, %p79
      %p82 = scmp.ne.s32.totalorder %s67, %s81
      %p83 = scmp.eq.s32.totalorder %s22, 0
      %p84 = por %p82, %p83
      %s86 = sadd.s32 %s85, 1
      %p89 = scmp.eq.s32.totalorder %s16, 1
      %p90 = scmp.ne.s32.totalorder %s85, %s87
      %p91 = scmp.eq.s32.totalorder %s16, 0
      %p92 = por %p90, %p91
      %p93 = scmp.ne.s32.totalorder %s85, %s87
      %p94 = scmp.eq.s32.totalorder %s21, 1
      %p95 = por %p93, %p94
      %p96 = scmp.ne.s32.totalorder %s87, %s88
      %p97 = scmp.eq.s32.totalorder %s21, 0
      %p98 = por %p96, %p97
      %p99 = scmp.ne.s32.totalorder %s87, %s88
      %p100 = scmp.eq.s32.totalorder %s22, 1
      %p101 = por %p99, %p100
      %p103 = scmp.ne.s32.totalorder %s88, %s102
      %p104 = scmp.eq.s32.totalorder %s22, 0
      %p105 = por %p103, %p104
      %s106 = sadd.s32 %s23, %s24
      %s107 = sadd.s32 %s35, %s31
      %s108 = ssub.s32 %s106, %s107
      %p109 = scmp.eq.s32.totalorder %s108, 0
      %s111 = sadd.s32 %s110, 1
      %s112 = scalar_select %p109, %s110, %s111
      %p115 = pneg %p109
      %p116 = scmp.eq.s32.totalorder %s16, 1
      %p117 = por %p115, %p116
      %p118 = scmp.ne.s32.totalorder %s110, %s113
      %p119 = scmp.eq.s32.totalorder %s16, 0
      %p120 = por %p118, %p119
      %p121 = scmp.ne.s32.totalorder %s110, %s113
      %p122 = scmp.eq.s32.totalorder %s21, 1
      %p123 = por %p121, %p122
      %p124 = scmp.ne.s32.totalorder %s113, %s114
      %p125 = scmp.eq.s32.totalorder %s21, 0
      %p126 = por %p124, %p125
      %p127 = scmp.ne.s32.totalorder %s113, %s114
      %p128 = scmp.eq.s32.totalorder %s22, 1
      %p129 = por %p127, %p128
      %p131 = scmp.ne.s32.totalorder %s114, %s130
      %p132 = scmp.eq.s32.totalorder %s22, 0
      %p133 = por %p131, %p132
      %p134 = scmp.le.s32.totalorder 1, %s16
      %p135 = scmp.lt.s32.totalorder %s16, 3
      %p136 = pnand %p134, %p135
      %p137 = pneg %p136
      // Predicated region
      $region9: #{tpu_custom_call.1} parent=5 // pred_check
        _
      $region10: #{tpu_custom_call.1} parent=5 // pred_check_branch
        %139 = sbr.rel (%p136) target = $region12
      $region11: #{tpu_custom_call.1} parent=5 // pred_region
        %s140 = ssub.s32 %s16, 1
        // Predicated region
        $region13: #{tpu_custom_call.1} parent=11 // pred_check
          %p141 = pneg %p77
        $region14: #{tpu_custom_call.1} parent=11 // pred_check_branch
          %143 = sbr.rel (%p141) target = $region16
        $region15: #{tpu_custom_call.1} parent=11 // pred_region
          %s145 = ssub.s32 2048, 2048
          %146 = vsyncadd [#allocation7], %s145
          %s147 = sshll.u32 [#allocation6], 4
          %s148 = int_to_ptr.vmem [resolvable:$true] %s147
          %153 = dma.hbm_to_vmem [thread:$0]  %s1, 2048, %s148, [#allocation7], 128, 128, 8
        $region16: #{tpu_custom_call.1} parent=11 // pred_fallthru
          _
        // Predicated region
        $region17: #{tpu_custom_call.1} parent=11 // pred_check
          %p154 = pneg %p98
        $region18: #{tpu_custom_call.1} parent=11 // pred_check_branch
          %156 = sbr.rel (%p154) target = $region20
        $region19: #{tpu_custom_call.1} parent=11 // pred_region
          %s158 = ssub.s32 16, 16
          %159 = vsyncadd [#allocation7], %s158
          %s161 = sshll.u32 [#allocation8], 4
          %s162 = int_to_ptr.vmem [resolvable:$true] %s161
          %164 = dma.hbm_to_vmem [thread:$0]  %s2, 16, %s162, [#allocation7]
        $region20: #{tpu_custom_call.1} parent=11 // pred_fallthru
          _
      $region12: #{tpu_custom_call.1} parent=5 // pred_fallthru
        _
      %p165 = scmp.lt.s32.totalorder %s16, 2
      // Predicated region
      $region21: #{tpu_custom_call.1} parent=5 // pred_check
        %p166 = pneg %p165
      $region22: #{tpu_custom_call.1} parent=5 // pred_check_branch
        %168 = sbr.rel (%p166) target = $region24
      $region23: #{tpu_custom_call.1} parent=5 // pred_region
        // Predicated region
        $region25: #{tpu_custom_call.1} parent=23 // pred_check
          %p169 = pneg %p50
        $region26: #{tpu_custom_call.1} parent=23 // pred_check_branch
          %171 = sbr.rel (%p169) target = $region28
        $region27: #{tpu_custom_call.1} parent=23 // pred_region
          %s172 = sand.u32 %s40, 1
          %s173 = scalar_lea.sflag [#allocation4], %s172
          %s174 = sand.u32 %s40, 1
          %s175 = smul.addr %s174, 432
          %s176 = scalar_lea.vmem [#allocation3], %s175
          %s177 = sadd.s32 %s23, %s24
          %s179 = ssub.s32 6912, 6912
          %180 = vsyncadd %s173, %s179
          %s181 = smul.addr %s177, 54
          %s182 = smul.addr %s181, 128
          %s183 = scalar_lea.hbm %s0, %s182
          %s184 = sshll.u32 %s176, 4
          %s185 = int_to_ptr.vmem [resolvable:$true] %s184
          %190 = dma.hbm_to_vmem [thread:$0]  %s183, 6912, %s185, %s173, 128, 128, 8
        $region28: #{tpu_custom_call.1} parent=23 // pred_fallthru
          _
      $region24: #{tpu_custom_call.1} parent=5 // pred_fallthru
        _
      %p191 = scmp.le.s32.totalorder 1, %s16
      %p192 = scmp.lt.s32.totalorder %s16, 3
      %p193 = pnand %p191, %p192
      %p194 = pneg %p193
      // Predicated region
      $region29: #{tpu_custom_call.1} parent=5 // pred_check
        _
      $region30: #{tpu_custom_call.1} parent=5 // pred_check_branch
        %196 = sbr.rel (%p193) target = $region32
      $region31: #{tpu_custom_call.1} parent=5 // pred_region
        %s197 = ssub.s32 %s16, 1
        %s198 = sand.u32 %s43, 1
        %s199 = scalar_lea.sflag [#allocation4], %s198
        %s200 = sand.u32 %s43, 1
        %s201 = smul.addr %s200, 432
        %s202 = scalar_lea.vmem [#allocation3], %s201
        // Predicated region
        $region33: #{tpu_custom_call.1} parent=31 // pred_check
          %p203 = pneg %p56
        $region34: #{tpu_custom_call.1} parent=31 // pred_check_branch
          %205 = sbr.rel (%p203) target = $region36
        $region35: #{tpu_custom_call.1} parent=31 // pred_region
          %206 = dma.done %s199, 6912
        $region36: #{tpu_custom_call.1} parent=31 // pred_fallthru
          _
        // Predicated region
        $region37: #{tpu_custom_call.1} parent=31 // pred_check
          %p207 = pneg %p77
        $region38: #{tpu_custom_call.1} parent=31 // pred_check_branch
          %209 = sbr.rel (%p207) target = $region40
        $region39: #{tpu_custom_call.1} parent=31 // pred_region
          %210 = dma.done [#allocation7], 2048
        $region40: #{tpu_custom_call.1} parent=31 // pred_fallthru
          _
        // Predicated region
        $region41: #{tpu_custom_call.1} parent=31 // pred_check
          %p211 = pneg %p98
        $region42: #{tpu_custom_call.1} parent=31 // pred_check_branch
          %213 = sbr.rel (%p211) target = $region44
        $region43: #{tpu_custom_call.1} parent=31 // pred_region
          %214 = dma.done [#allocation7], 16
        $region44: #{tpu_custom_call.1} parent=31 // pred_fallthru
          _
        %s215 = sand.u32 %s43, 1
        %s216 = scalar_lea.sflag [#allocation4], %s215
        %s217 = sand.u32 %s43, 1
        %s218 = smul.addr %s217, 432
        %s219 = scalar_lea.vmem [#allocation3], %s218
        %p220 = pneg %p56
        %p221 = pneg %p53
        %p222 = pneg %p77
        %p223 = pneg %p74
        %p224 = pneg %p98
        %p225 = pneg %p95
        %p226 = pneg %p126
        %p227 = pneg %p123
        %s228 = sand.u32 %s113, 1
        %s229 = scalar_lea.sflag [#allocation5], %s228
        %s230 = sand.u32 %s113, 1
        %s231 = smul.addr %s230, 256
        %s232 = scalar_lea.vmem [#allocation9], %s231
        %s233 = sadd.s32 %s25, %s26
        %s234 = sadd.s32 %s25, %s26
        %v235 = vld [vmem:[%s202] sm:$0xff]
        %v236 = vld [vmem:[%s202 + $0x8] sm:$0xff]
        %v237 = vld [vmem:[%s202 + $0x18] sm:$0xff]
        %v238 = vld [vmem:[%s202 + $0x20] sm:$0xff]
        %v239 = vld [vmem:[%s202 + $0x30] sm:$0xff]
        %v240 = vld [vmem:[%s202 + $0x38] sm:$0xff]
        %v241 = vld [vmem:[%s202 + $0x48] sm:$0xff]
        %v242 = vld [vmem:[%s202 + $0x50] sm:$0xff]
        %v243 = vld [vmem:[%s202 + $0x60] sm:$0xff]
        %v244 = vld [vmem:[%s202 + $0x68] sm:$0xff]
        %v245 = vld [vmem:[%s202 + $0x78] sm:$0xff]
        %v246 = vld [vmem:[%s202 + $0x80] sm:$0xff]
        %v247 = vld [vmem:[%s202 + $0x90] sm:$0xff]
        %v248 = vld [vmem:[%s202 + $0x98] sm:$0xff]
        %v249 = vld [vmem:[%s202 + $0xa8] sm:$0xff]
        %v250 = vld [vmem:[%s202 + $0xb0] sm:$0xff]
        %v251 = vld [vmem:[%s202 + $0xc0] sm:$0xff]
        %v252 = vld [vmem:[%s202 + $0xc8] sm:$0xff]
        %v253 = vld [vmem:[%s202 + $0xd8] sm:$0xff]
        %v254 = vld [vmem:[%s202 + $0xe0] sm:$0xff]
        %v255 = vld [vmem:[%s202 + $0xf0] sm:$0xff]
        %v256 = vld [vmem:[%s202 + $0xf8] sm:$0xff]
        %v257 = vld [vmem:[%s202 + $0x108] sm:$0xff]
        %v258 = vld [vmem:[%s202 + $0x110] sm:$0xff]
        %v259 = vld [vmem:[%s202 + $0x120] sm:$0xff]
        %v260 = vld [vmem:[%s202 + $0x128] sm:$0xff]
        %v261 = vld [vmem:[%s202 + $0x138] sm:$0xff]
        %v262 = vld [vmem:[%s202 + $0x140] sm:$0xff]
        %v263 = vld [vmem:[%s202 + $0x150] sm:$0xff]
        %v264 = vld [vmem:[%s202 + $0x158] sm:$0xff]
        %v265 = vld [vmem:[%s202 + $0x168] sm:$0xff]
        %v266 = vld [vmem:[%s202 + $0x170] sm:$0xff]
        %v267 = vld [vmem:[%s202 + $0x1] sm:$0xff]
        %v268 = vld [vmem:[%s202 + $0x9] sm:$0xff]
        %v269 = vld [vmem:[%s202 + $0x19] sm:$0xff]
        %v270 = vld [vmem:[%s202 + $0x21] sm:$0xff]
        %v271 = vld [vmem:[%s202 + $0x31] sm:$0xff]
        %v272 = vld [vmem:[%s202 + $0x39] sm:$0xff]
        %v273 = vld [vmem:[%s202 + $0x49] sm:$0xff]
        %v274 = vld [vmem:[%s202 + $0x51] sm:$0xff]
        %v275 = vld [vmem:[%s202 + $0x61] sm:$0xff]
        %v276 = vld [vmem:[%s202 + $0x69] sm:$0xff]
        %v277 = vld [vmem:[%s202 + $0x79] sm:$0xff]
        %v278 = vld [vmem:[%s202 + $0x81] sm:$0xff]
        %v279 = vld [vmem:[%s202 + $0x91] sm:$0xff]
        %v280 = vld [vmem:[%s202 + $0x99] sm:$0xff]
        %v281 = vld [vmem:[%s202 + $0xa9] sm:$0xff]
        %v282 = vld [vmem:[%s202 + $0xb1] sm:$0xff]
        %v283 = vld [vmem:[%s202 + $0xc1] sm:$0xff]
        %v284 = vld [vmem:[%s202 + $0xc9] sm:$0xff]
        %v285 = vld [vmem:[%s202 + $0xd9] sm:$0xff]
        %v286 = vld [vmem:[%s202 + $0xe1] sm:$0xff]
        %v287 = vld [vmem:[%s202 + $0xf1] sm:$0xff]
        %v288 = vld [vmem:[%s202 + $0xf9] sm:$0xff]
        %v289 = vld [vmem:[%s202 + $0x109] sm:$0xff]
        %v290 = vld [vmem:[%s202 + $0x111] sm:$0xff]
        %v291 = vld [vmem:[%s202 + $0x121] sm:$0xff]
        %v292 = vld [vmem:[%s202 + $0x129] sm:$0xff]
        %v293 = vld [vmem:[%s202 + $0x139] sm:$0xff]
        %v294 = vld [vmem:[%s202 + $0x141] sm:$0xff]
        %v295 = vld [vmem:[%s202 + $0x151] sm:$0xff]
        %v296 = vld [vmem:[%s202 + $0x159] sm:$0xff]
        %v297 = vld [vmem:[%s202 + $0x169] sm:$0xff]
        %v298 = vld [vmem:[%s202 + $0x171] sm:$0xff]
        %v299 = vld [vmem:[%s202 + $0x2] sm:$0xff]
        %v300 = vld [vmem:[%s202 + $0xa] sm:$0xff]
        %v301 = vld [vmem:[%s202 + $0x1a] sm:$0xff]
        %v302 = vld [vmem:[%s202 + $0x22] sm:$0xff]
        %v303 = vld [vmem:[%s202 + $0x32] sm:$0xff]
        %v304 = vld [vmem:[%s202 + $0x3a] sm:$0xff]
        %v305 = vld [vmem:[%s202 + $0x4a] sm:$0xff]
        %v306 = vld [vmem:[%s202 + $0x52] sm:$0xff]
        %v307 = vld [vmem:[%s202 + $0x62] sm:$0xff]
        %v308 = vld [vmem:[%s202 + $0x6a] sm:$0xff]
        %v309 = vld [vmem:[%s202 + $0x7a] sm:$0xff]
        %v310 = vld [vmem:[%s202 + $0x82] sm:$0xff]
        %v311 = vld [vmem:[%s202 + $0x92] sm:$0xff]
        %v312 = vld [vmem:[%s202 + $0x9a] sm:$0xff]
        %v313 = vld [vmem:[%s202 + $0xaa] sm:$0xff]
        %v314 = vld [vmem:[%s202 + $0xb2] sm:$0xff]
        %v315 = vld [vmem:[%s202 + $0xc2] sm:$0xff]
        %v316 = vld [vmem:[%s202 + $0xca] sm:$0xff]
        %v317 = vld [vmem:[%s202 + $0xda] sm:$0xff]
        %v318 = vld [vmem:[%s202 + $0xe2] sm:$0xff]
        %v319 = vld [vmem:[%s202 + $0xf2] sm:$0xff]
        %v320 = vld [vmem:[%s202 + $0xfa] sm:$0xff]
        %v321 = vld [vmem:[%s202 + $0x10a] sm:$0xff]
        %v322 = vld [vmem:[%s202 + $0x112] sm:$0xff]
        %v323 = vld [vmem:[%s202 + $0x122] sm:$0xff]
        %v324 = vld [vmem:[%s202 + $0x12a] sm:$0xff]
        %v325 = vld [vmem:[%s202 + $0x13a] sm:$0xff]
        %v326 = vld [vmem:[%s202 + $0x142] sm:$0xff]
        %v327 = vld [vmem:[%s202 + $0x152] sm:$0xff]
        %v328 = vld [vmem:[%s202 + $0x15a] sm:$0xff]
        %v329 = vld [vmem:[%s202 + $0x16a] sm:$0xff]
        %v330 = vld [vmem:[%s202 + $0x172] sm:$0xff]
        %s331 = scalar_lea.vmem %s202, 24 [#allocation3]
        %v332 = vld [vmem:[%s331] sm:$0xff]
        %v333 = vld [vmem:[%s331 + $0x8] sm:$0xff]
        %v334 = vld [vmem:[%s331 + $0x18] sm:$0xff]
        %v335 = vld [vmem:[%s331 + $0x20] sm:$0xff]
        %v336 = vld [vmem:[%s331 + $0x30] sm:$0xff]
        %v337 = vld [vmem:[%s331 + $0x38] sm:$0xff]
        %v338 = vld [vmem:[%s331 + $0x48] sm:$0xff]
        %v339 = vld [vmem:[%s331 + $0x50] sm:$0xff]
        %v340 = vld [vmem:[%s331 + $0x60] sm:$0xff]
        %v341 = vld [vmem:[%s331 + $0x68] sm:$0xff]
        %v342 = vld [vmem:[%s331 + $0x78] sm:$0xff]
        %v343 = vld [vmem:[%s331 + $0x80] sm:$0xff]
        %v344 = vld [vmem:[%s331 + $0x90] sm:$0xff]
        %v345 = vld [vmem:[%s331 + $0x98] sm:$0xff]
        %v346 = vld [vmem:[%s331 + $0xa8] sm:$0xff]
        %v347 = vld [vmem:[%s331 + $0xb0] sm:$0xff]
        %v348 = vld [vmem:[%s331 + $0xc0] sm:$0xff]
        %v349 = vld [vmem:[%s331 + $0xc8] sm:$0xff]
        %v350 = vld [vmem:[%s331 + $0xd8] sm:$0xff]
        %v351 = vld [vmem:[%s331 + $0xe0] sm:$0xff]
        %v352 = vld [vmem:[%s331 + $0xf0] sm:$0xff]
        %v353 = vld [vmem:[%s331 + $0xf8] sm:$0xff]
        %v354 = vld [vmem:[%s331 + $0x108] sm:$0xff]
        %v355 = vld [vmem:[%s331 + $0x110] sm:$0xff]
        %v356 = vld [vmem:[%s331 + $0x120] sm:$0xff]
        %v357 = vld [vmem:[%s331 + $0x128] sm:$0xff]
        %v358 = vld [vmem:[%s331 + $0x138] sm:$0xff]
        %v359 = vld [vmem:[%s331 + $0x140] sm:$0xff]
        %v360 = vld [vmem:[%s331 + $0x150] sm:$0xff]
        %v361 = vld [vmem:[%s331 + $0x158] sm:$0xff]
        %v362 = vld [vmem:[%s331 + $0x168] sm:$0xff]
        %v363 = vld [vmem:[%s331 + $0x170] sm:$0xff]
        %v364 = vld [vmem:[%s331 + $0x1] sm:$0xff]
        %v365 = vld [vmem:[%s331 + $0x9] sm:$0xff]
        %v366 = vld [vmem:[%s331 + $0x19] sm:$0xff]
        %v367 = vld [vmem:[%s331 + $0x21] sm:$0xff]
        %v368 = vld [vmem:[%s331 + $0x31] sm:$0xff]
        %v369 = vld [vmem:[%s331 + $0x39] sm:$0xff]
        %v370 = vld [vmem:[%s331 + $0x49] sm:$0xff]
        %v371 = vld [vmem:[%s331 + $0x51] sm:$0xff]
        %v372 = vld [vmem:[%s331 + $0x61] sm:$0xff]
        %v373 = vld [vmem:[%s331 + $0x69] sm:$0xff]
        %v374 = vld [vmem:[%s331 + $0x79] sm:$0xff]
        %v375 = vld [vmem:[%s331 + $0x81] sm:$0xff]
        %v376 = vld [vmem:[%s331 + $0x91] sm:$0xff]
        %v377 = vld [vmem:[%s331 + $0x99] sm:$0xff]
        %v378 = vld [vmem:[%s331 + $0xa9] sm:$0xff]
        %v379 = vld [vmem:[%s331 + $0xb1] sm:$0xff]
        %v380 = vld [vmem:[%s331 + $0xc1] sm:$0xff]
        %v381 = vld [vmem:[%s331 + $0xc9] sm:$0xff]
        %v382 = vld [vmem:[%s331 + $0xd9] sm:$0xff]
        %v383 = vld [vmem:[%s331 + $0xe1] sm:$0xff]
        %v384 = vld [vmem:[%s331 + $0xf1] sm:$0xff]
        %v385 = vld [vmem:[%s331 + $0xf9] sm:$0xff]
        %v386 = vld [vmem:[%s331 + $0x109] sm:$0xff]
        %v387 = vld [vmem:[%s331 + $0x111] sm:$0xff]
        %v388 = vld [vmem:[%s331 + $0x121] sm:$0xff]
        %v389 = vld [vmem:[%s331 + $0x129] sm:$0xff]
        %v390 = vld [vmem:[%s331 + $0x139] sm:$0xff]
        %v391 = vld [vmem:[%s331 + $0x141] sm:$0xff]
        %v392 = vld [vmem:[%s331 + $0x151] sm:$0xff]
        %v393 = vld [vmem:[%s331 + $0x159] sm:$0xff]
        %v394 = vld [vmem:[%s331 + $0x169] sm:$0xff]
        %v395 = vld [vmem:[%s331 + $0x171] sm:$0xff]
        %v396 = vld [vmem:[%s331 + $0x2] sm:$0xff]
        %v397 = vld [vmem:[%s331 + $0xa] sm:$0xff]
        %v398 = vld [vmem:[%s331 + $0x1a] sm:$0xff]
        %v399 = vld [vmem:[%s331 + $0x22] sm:$0xff]
        %v400 = vld [vmem:[%s331 + $0x32] sm:$0xff]
        %v401 = vld [vmem:[%s331 + $0x3a] sm:$0xff]
        %v402 = vld [vmem:[%s331 + $0x4a] sm:$0xff]
        %v403 = vld [vmem:[%s331 + $0x52] sm:$0xff]
        %v404 = vld [vmem:[%s331 + $0x62] sm:$0xff]
        %v405 = vld [vmem:[%s331 + $0x6a] sm:$0xff]
        %v406 = vld [vmem:[%s331 + $0x7a] sm:$0xff]
        %v407 = vld [vmem:[%s331 + $0x82] sm:$0xff]
        %v408 = vld [vmem:[%s331 + $0x92] sm:$0xff]
        %v409 = vld [vmem:[%s331 + $0x9a] sm:$0xff]
        %v410 = vld [vmem:[%s331 + $0xaa] sm:$0xff]
        %v411 = vld [vmem:[%s331 + $0xb2] sm:$0xff]
        %v412 = vld [vmem:[%s331 + $0xc2] sm:$0xff]
        %v413 = vld [vmem:[%s331 + $0xca] sm:$0xff]
        %v414 = vld [vmem:[%s331 + $0xda] sm:$0xff]
        %v415 = vld [vmem:[%s331 + $0xe2] sm:$0xff]
        %v416 = vld [vmem:[%s331 + $0xf2] sm:$0xff]
        %v417 = vld [vmem:[%s331 + $0xfa] sm:$0xff]
        %v418 = vld [vmem:[%s331 + $0x10a] sm:$0xff]
        %v419 = vld [vmem:[%s331 + $0x112] sm:$0xff]
        %v420 = vld [vmem:[%s331 + $0x122] sm:$0xff]
        %v421 = vld [vmem:[%s331 + $0x12a] sm:$0xff]
        %v422 = vld [vmem:[%s331 + $0x13a] sm:$0xff]
        %v423 = vld [vmem:[%s331 + $0x142] sm:$0xff]
        %v424 = vld [vmem:[%s331 + $0x152] sm:$0xff]
        %v425 = vld [vmem:[%s331 + $0x15a] sm:$0xff]
        %v426 = vld [vmem:[%s331 + $0x16a] sm:$0xff]
        %v427 = vld [vmem:[%s331 + $0x172] sm:$0xff]
        %s428 = scalar_lea.vmem %s202, 48 [#allocation3]
        %v429 = vld [vmem:[%s428] sm:$0xff]
        %v430 = vld [vmem:[%s428 + $0x8] sm:$0xff]
        %v431 = vld [vmem:[%s428 + $0x18] sm:$0xff]
        %v432 = vld [vmem:[%s428 + $0x20] sm:$0xff]
        %v433 = vld [vmem:[%s428 + $0x30] sm:$0xff]
        %v434 = vld [vmem:[%s428 + $0x38] sm:$0xff]
        %v435 = vld [vmem:[%s428 + $0x48] sm:$0xff]
        %v436 = vld [vmem:[%s428 + $0x50] sm:$0xff]
        %v437 = vld [vmem:[%s428 + $0x60] sm:$0xff]
        %v438 = vld [vmem:[%s428 + $0x68] sm:$0xff]
        %v439 = vld [vmem:[%s428 + $0x78] sm:$0xff]
        %v440 = vld [vmem:[%s428 + $0x80] sm:$0xff]
        %v441 = vld [vmem:[%s428 + $0x90] sm:$0xff]
        %v442 = vld [vmem:[%s428 + $0x98] sm:$0xff]
        %v443 = vld [vmem:[%s428 + $0xa8] sm:$0xff]
        %v444 = vld [vmem:[%s428 + $0xb0] sm:$0xff]
        %v445 = vld [vmem:[%s428 + $0xc0] sm:$0xff]
        %v446 = vld [vmem:[%s428 + $0xc8] sm:$0xff]
        %v447 = vld [vmem:[%s428 + $0xd8] sm:$0xff]
        %v448 = vld [vmem:[%s428 + $0xe0] sm:$0xff]
        %v449 = vld [vmem:[%s428 + $0xf0] sm:$0xff]
        %v450 = vld [vmem:[%s428 + $0xf8] sm:$0xff]
        %v451 = vld [vmem:[%s428 + $0x108] sm:$0xff]
        %v452 = vld [vmem:[%s428 + $0x110] sm:$0xff]
        %v453 = vld [vmem:[%s428 + $0x120] sm:$0xff]
        %v454 = vld [vmem:[%s428 + $0x128] sm:$0xff]
        %v455 = vld [vmem:[%s428 + $0x138] sm:$0xff]
        %v456 = vld [vmem:[%s428 + $0x140] sm:$0xff]
        %v457 = vld [vmem:[%s428 + $0x150] sm:$0xff]
        %v458 = vld [vmem:[%s428 + $0x158] sm:$0xff]
        %v459 = vld [vmem:[%s428 + $0x168] sm:$0xff]
        %v460 = vld [vmem:[%s428 + $0x170] sm:$0xff]
        %v461 = vld [vmem:[%s428 + $0x1] sm:$0xff]
        %v462 = vld [vmem:[%s428 + $0x9] sm:$0xff]
        %v463 = vld [vmem:[%s428 + $0x19] sm:$0xff]
        %v464 = vld [vmem:[%s428 + $0x21] sm:$0xff]
        %v465 = vld [vmem:[%s428 + $0x31] sm:$0xff]
        %v466 = vld [vmem:[%s428 + $0x39] sm:$0xff]
        %v467 = vld [vmem:[%s428 + $0x49] sm:$0xff]
        %v468 = vld [vmem:[%s428 + $0x51] sm:$0xff]
        %v469 = vld [vmem:[%s428 + $0x61] sm:$0xff]
        %v470 = vld [vmem:[%s428 + $0x69] sm:$0xff]
        %v471 = vld [vmem:[%s428 + $0x79] sm:$0xff]
        %v472 = vld [vmem:[%s428 + $0x81] sm:$0xff]
        %v473 = vld [vmem:[%s428 + $0x91] sm:$0xff]
        %v474 = vld [vmem:[%s428 + $0x99] sm:$0xff]
        %v475 = vld [vmem:[%s428 + $0xa9] sm:$0xff]
        %v476 = vld [vmem:[%s428 + $0xb1] sm:$0xff]
        %v477 = vld [vmem:[%s428 + $0xc1] sm:$0xff]
        %v478 = vld [vmem:[%s428 + $0xc9] sm:$0xff]
        %v479 = vld [vmem:[%s428 + $0xd9] sm:$0xff]
        %v480 = vld [vmem:[%s428 + $0xe1] sm:$0xff]
        %v481 = vld [vmem:[%s428 + $0xf1] sm:$0xff]
        %v482 = vld [vmem:[%s428 + $0xf9] sm:$0xff]
        %v483 = vld [vmem:[%s428 + $0x109] sm:$0xff]
        %v484 = vld [vmem:[%s428 + $0x111] sm:$0xff]
        %v485 = vld [vmem:[%s428 + $0x121] sm:$0xff]
        %v486 = vld [vmem:[%s428 + $0x129] sm:$0xff]
        %v487 = vld [vmem:[%s428 + $0x139] sm:$0xff]
        %v488 = vld [vmem:[%s428 + $0x141] sm:$0xff]
        %v489 = vld [vmem:[%s428 + $0x151] sm:$0xff]
        %v490 = vld [vmem:[%s428 + $0x159] sm:$0xff]
        %v491 = vld [vmem:[%s428 + $0x169] sm:$0xff]
        %v492 = vld [vmem:[%s428 + $0x171] sm:$0xff]
        %v493 = vld [vmem:[%s428 + $0x2] sm:$0xff]
        %v494 = vld [vmem:[%s428 + $0xa] sm:$0xff]
        %v495 = vld [vmem:[%s428 + $0x1a] sm:$0xff]
        %v496 = vld [vmem:[%s428 + $0x22] sm:$0xff]
        %v497 = vld [vmem:[%s428 + $0x32] sm:$0xff]
        %v498 = vld [vmem:[%s428 + $0x3a] sm:$0xff]
        %v499 = vld [vmem:[%s428 + $0x4a] sm:$0xff]
        %v500 = vld [vmem:[%s428 + $0x52] sm:$0xff]
        %v501 = vld [vmem:[%s428 + $0x62] sm:$0xff]
        %v502 = vld [vmem:[%s428 + $0x6a] sm:$0xff]
        %v503 = vld [vmem:[%s428 + $0x7a] sm:$0xff]
        %v504 = vld [vmem:[%s428 + $0x82] sm:$0xff]
        %v505 = vld [vmem:[%s428 + $0x92] sm:$0xff]
        %v506 = vld [vmem:[%s428 + $0x9a] sm:$0xff]
        %v507 = vld [vmem:[%s428 + $0xaa] sm:$0xff]
        %v508 = vld [vmem:[%s428 + $0xb2] sm:$0xff]
        %v509 = vld [vmem:[%s428 + $0xc2] sm:$0xff]
        %v510 = vld [vmem:[%s428 + $0xca] sm:$0xff]
        %v511 = vld [vmem:[%s428 + $0xda] sm:$0xff]
        %v512 = vld [vmem:[%s428 + $0xe2] sm:$0xff]
        %v513 = vld [vmem:[%s428 + $0xf2] sm:$0xff]
        %v514 = vld [vmem:[%s428 + $0xfa] sm:$0xff]
        %v515 = vld [vmem:[%s428 + $0x10a] sm:$0xff]
        %v516 = vld [vmem:[%s428 + $0x112] sm:$0xff]
        %v517 = vld [vmem:[%s428 + $0x122] sm:$0xff]
        %v518 = vld [vmem:[%s428 + $0x12a] sm:$0xff]
        %v519 = vld [vmem:[%s428 + $0x13a] sm:$0xff]
        %v520 = vld [vmem:[%s428 + $0x142] sm:$0xff]
        %v521 = vld [vmem:[%s428 + $0x152] sm:$0xff]
        %v522 = vld [vmem:[%s428 + $0x15a] sm:$0xff]
        %v523 = vld [vmem:[%s428 + $0x16a] sm:$0xff]
        %v524 = vld [vmem:[%s428 + $0x172] sm:$0xff]
        %557 = vrot.lane.b32.xlu0 %v267, 8
        %v558 = vpop.permute.xlu0 %557
        %559 = vrot.lane.b32.xlu0 %v268, 8
        %v560 = vpop.permute.xlu0 %559
        %561 = vrot.lane.b32.xlu0 %v269, 8
        %v562 = vpop.permute.xlu0 %561
        %563 = vrot.lane.b32.xlu0 %v270, 8
        %v564 = vpop.permute.xlu0 %563
        %565 = vrot.lane.b32.xlu0 %v271, 8
        %v566 = vpop.permute.xlu0 %565
        %567 = vrot.lane.b32.xlu0 %v272, 8
        %v568 = vpop.permute.xlu0 %567
        %569 = vrot.lane.b32.xlu0 %v273, 8
        %v570 = vpop.permute.xlu0 %569
        %571 = vrot.lane.b32.xlu0 %v274, 8
        %v572 = vpop.permute.xlu0 %571
        %573 = vrot.lane.b32.xlu0 %v275, 8
        %v574 = vpop.permute.xlu0 %573
        %575 = vrot.lane.b32.xlu0 %v276, 8
        %v576 = vpop.permute.xlu0 %575
        %577 = vrot.lane.b32.xlu0 %v277, 8
        %v578 = vpop.permute.xlu0 %577
        %579 = vrot.lane.b32.xlu0 %v278, 8
        %v580 = vpop.permute.xlu0 %579
        %581 = vrot.lane.b32.xlu0 %v279, 8
        %v582 = vpop.permute.xlu0 %581
        %583 = vrot.lane.b32.xlu0 %v280, 8
        %v584 = vpop.permute.xlu0 %583
        %585 = vrot.lane.b32.xlu0 %v281, 8
        %v586 = vpop.permute.xlu0 %585
        %587 = vrot.lane.b32.xlu0 %v282, 8
        %v588 = vpop.permute.xlu0 %587
        %589 = vrot.lane.b32.xlu0 %v283, 8
        %v590 = vpop.permute.xlu0 %589
        %591 = vrot.lane.b32.xlu0 %v284, 8
        %v592 = vpop.permute.xlu0 %591
        %593 = vrot.lane.b32.xlu0 %v285, 8
        %v594 = vpop.permute.xlu0 %593
        %595 = vrot.lane.b32.xlu0 %v286, 8
        %v596 = vpop.permute.xlu0 %595
        %597 = vrot.lane.b32.xlu0 %v287, 8
        %v598 = vpop.permute.xlu0 %597
        %599 = vrot.lane.b32.xlu0 %v288, 8
        %v600 = vpop.permute.xlu0 %599
        %601 = vrot.lane.b32.xlu0 %v289, 8
        %v602 = vpop.permute.xlu0 %601
        %603 = vrot.lane.b32.xlu0 %v290, 8
        %v604 = vpop.permute.xlu0 %603
        %605 = vrot.lane.b32.xlu0 %v291, 8
        %v606 = vpop.permute.xlu0 %605
        %607 = vrot.lane.b32.xlu0 %v292, 8
        %v608 = vpop.permute.xlu0 %607
        %609 = vrot.lane.b32.xlu0 %v293, 8
        %v610 = vpop.permute.xlu0 %609
        %611 = vrot.lane.b32.xlu0 %v294, 8
        %v612 = vpop.permute.xlu0 %611
        %613 = vrot.lane.b32.xlu0 %v295, 8
        %v614 = vpop.permute.xlu0 %613
        %615 = vrot.lane.b32.xlu0 %v296, 8
        %v616 = vpop.permute.xlu0 %615
        %617 = vrot.lane.b32.xlu0 %v297, 8
        %v618 = vpop.permute.xlu0 %617
        %619 = vrot.lane.b32.xlu0 %v298, 8
        %v620 = vpop.permute.xlu0 %619
        %685 = vrot.lane.b32.xlu0 %v299, 16
        %v686 = vpop.permute.xlu0 %685
        %687 = vrot.lane.b32.xlu0 %v300, 16
        %v688 = vpop.permute.xlu0 %687
        %689 = vrot.lane.b32.xlu0 %v301, 16
        %v690 = vpop.permute.xlu0 %689
        %691 = vrot.lane.b32.xlu0 %v302, 16
        %v692 = vpop.permute.xlu0 %691
        %693 = vrot.lane.b32.xlu0 %v303, 16
        %v694 = vpop.permute.xlu0 %693
        %695 = vrot.lane.b32.xlu0 %v304, 16
        %v696 = vpop.permute.xlu0 %695
        %697 = vrot.lane.b32.xlu0 %v305, 16
        %v698 = vpop.permute.xlu0 %697
        %699 = vrot.lane.b32.xlu0 %v306, 16
        %v700 = vpop.permute.xlu0 %699
        %701 = vrot.lane.b32.xlu0 %v307, 16
        %v702 = vpop.permute.xlu0 %701
        %703 = vrot.lane.b32.xlu0 %v308, 16
        %v704 = vpop.permute.xlu0 %703
        %705 = vrot.lane.b32.xlu0 %v309, 16
        %v706 = vpop.permute.xlu0 %705
        %707 = vrot.lane.b32.xlu0 %v310, 16
        %v708 = vpop.permute.xlu0 %707
        %709 = vrot.lane.b32.xlu0 %v311, 16
        %v710 = vpop.permute.xlu0 %709
        %711 = vrot.lane.b32.xlu0 %v312, 16
        %v712 = vpop.permute.xlu0 %711
        %713 = vrot.lane.b32.xlu0 %v313, 16
        %v714 = vpop.permute.xlu0 %713
        %715 = vrot.lane.b32.xlu0 %v314, 16
        %v716 = vpop.permute.xlu0 %715
        %717 = vrot.lane.b32.xlu0 %v315, 16
        %v718 = vpop.permute.xlu0 %717
        %719 = vrot.lane.b32.xlu0 %v316, 16
        %v720 = vpop.permute.xlu0 %719
        %721 = vrot.lane.b32.xlu0 %v317, 16
        %v722 = vpop.permute.xlu0 %721
        %723 = vrot.lane.b32.xlu0 %v318, 16
        %v724 = vpop.permute.xlu0 %723
        %725 = vrot.lane.b32.xlu0 %v319, 16
        %v726 = vpop.permute.xlu0 %725
        %727 = vrot.lane.b32.xlu0 %v320, 16
        %v728 = vpop.permute.xlu0 %727
        %729 = vrot.lane.b32.xlu0 %v321, 16
        %v730 = vpop.permute.xlu0 %729
        %731 = vrot.lane.b32.xlu0 %v322, 16
        %v732 = vpop.permute.xlu0 %731
        %733 = vrot.lane.b32.xlu0 %v323, 16
        %v734 = vpop.permute.xlu0 %733
        %735 = vrot.lane.b32.xlu0 %v324, 16
        %v736 = vpop.permute.xlu0 %735
        %737 = vrot.lane.b32.xlu0 %v325, 16
        %v738 = vpop.permute.xlu0 %737
        %739 = vrot.lane.b32.xlu0 %v326, 16
        %v740 = vpop.permute.xlu0 %739
        %741 = vrot.lane.b32.xlu0 %v327, 16
        %v742 = vpop.permute.xlu0 %741
        %743 = vrot.lane.b32.xlu0 %v328, 16
        %v744 = vpop.permute.xlu0 %743
        %745 = vrot.lane.b32.xlu0 %v329, 16
        %v746 = vpop.permute.xlu0 %745
        %747 = vrot.lane.b32.xlu0 %v330, 16
        %v748 = vpop.permute.xlu0 %747
        %813 = vrot.lane.b32.xlu0 %v332, 24
        %v814 = vpop.permute.xlu0 %813
        %815 = vrot.lane.b32.xlu0 %v333, 24
        %v816 = vpop.permute.xlu0 %815
        %817 = vrot.lane.b32.xlu0 %v334, 24
        %v818 = vpop.permute.xlu0 %817
        %819 = vrot.lane.b32.xlu0 %v335, 24
        %v820 = vpop.permute.xlu0 %819
        %821 = vrot.lane.b32.xlu0 %v336, 24
        %v822 = vpop.permute.xlu0 %821
        %823 = vrot.lane.b32.xlu0 %v337, 24
        %v824 = vpop.permute.xlu0 %823
        %825 = vrot.lane.b32.xlu0 %v338, 24
        %v826 = vpop.permute.xlu0 %825
        %827 = vrot.lane.b32.xlu0 %v339, 24
        %v828 = vpop.permute.xlu0 %827
        %829 = vrot.lane.b32.xlu0 %v340, 24
        %v830 = vpop.permute.xlu0 %829
        %831 = vrot.lane.b32.xlu0 %v341, 24
        %v832 = vpop.permute.xlu0 %831
        %833 = vrot.lane.b32.xlu0 %v342, 24
        %v834 = vpop.permute.xlu0 %833
        %835 = vrot.lane.b32.xlu0 %v343, 24
        %v836 = vpop.permute.xlu0 %835
        %837 = vrot.lane.b32.xlu0 %v344, 24
        %v838 = vpop.permute.xlu0 %837
        %839 = vrot.lane.b32.xlu0 %v345, 24
        %v840 = vpop.permute.xlu0 %839
        %841 = vrot.lane.b32.xlu0 %v346, 24
        %v842 = vpop.permute.xlu0 %841
        %843 = vrot.lane.b32.xlu0 %v347, 24
        %v844 = vpop.permute.xlu0 %843
        %845 = vrot.lane.b32.xlu0 %v348, 24
        %v846 = vpop.permute.xlu0 %845
        %847 = vrot.lane.b32.xlu0 %v349, 24
        %v848 = vpop.permute.xlu0 %847
        %849 = vrot.lane.b32.xlu0 %v350, 24
        %v850 = vpop.permute.xlu0 %849
        %851 = vrot.lane.b32.xlu0 %v351, 24
        %v852 = vpop.permute.xlu0 %851
        %853 = vrot.lane.b32.xlu0 %v352, 24
        %v854 = vpop.permute.xlu0 %853
        %855 = vrot.lane.b32.xlu0 %v353, 24
        %v856 = vpop.permute.xlu0 %855
        %857 = vrot.lane.b32.xlu0 %v354, 24
        %v858 = vpop.permute.xlu0 %857
        %859 = vrot.lane.b32.xlu0 %v355, 24
        %v860 = vpop.permute.xlu0 %859
        %861 = vrot.lane.b32.xlu0 %v356, 24
        %v862 = vpop.permute.xlu0 %861
        %863 = vrot.lane.b32.xlu0 %v357, 24
        %v864 = vpop.permute.xlu0 %863
        %865 = vrot.lane.b32.xlu0 %v358, 24
        %v866 = vpop.permute.xlu0 %865
        %867 = vrot.lane.b32.xlu0 %v359, 24
        %v868 = vpop.permute.xlu0 %867
        %869 = vrot.lane.b32.xlu0 %v360, 24
        %v870 = vpop.permute.xlu0 %869
        %871 = vrot.lane.b32.xlu0 %v361, 24
        %v872 = vpop.permute.xlu0 %871
        %873 = vrot.lane.b32.xlu0 %v362, 24
        %v874 = vpop.permute.xlu0 %873
        %875 = vrot.lane.b32.xlu0 %v363, 24
        %v876 = vpop.permute.xlu0 %875
        %941 = vrot.lane.b32.xlu0 %v364, 32
        %v942 = vpop.permute.xlu0 %941
        %943 = vrot.lane.b32.xlu0 %v365, 32
        %v944 = vpop.permute.xlu0 %943
        %945 = vrot.lane.b32.xlu0 %v366, 32
        %v946 = vpop.permute.xlu0 %945
        %947 = vrot.lane.b32.xlu0 %v367, 32
        %v948 = vpop.permute.xlu0 %947
        %949 = vrot.lane.b32.xlu0 %v368, 32
        %v950 = vpop.permute.xlu0 %949
        %951 = vrot.lane.b32.xlu0 %v369, 32
        %v952 = vpop.permute.xlu0 %951
        %953 = vrot.lane.b32.xlu0 %v370, 32
        %v954 = vpop.permute.xlu0 %953
        %955 = vrot.lane.b32.xlu0 %v371, 32
        %v956 = vpop.permute.xlu0 %955
        %957 = vrot.lane.b32.xlu0 %v372, 32
        %v958 = vpop.permute.xlu0 %957
        %959 = vrot.lane.b32.xlu0 %v373, 32
        %v960 = vpop.permute.xlu0 %959
        %961 = vrot.lane.b32.xlu0 %v374, 32
        %v962 = vpop.permute.xlu0 %961
        %963 = vrot.lane.b32.xlu0 %v375, 32
        %v964 = vpop.permute.xlu0 %963
        %965 = vrot.lane.b32.xlu0 %v376, 32
        %v966 = vpop.permute.xlu0 %965
        %967 = vrot.lane.b32.xlu0 %v377, 32
        %v968 = vpop.permute.xlu0 %967
        %969 = vrot.lane.b32.xlu0 %v378, 32
        %v970 = vpop.permute.xlu0 %969
        %971 = vrot.lane.b32.xlu0 %v379, 32
        %v972 = vpop.permute.xlu0 %971
        %973 = vrot.lane.b32.xlu0 %v380, 32
        %v974 = vpop.permute.xlu0 %973
        %975 = vrot.lane.b32.xlu0 %v381, 32
        %v976 = vpop.permute.xlu0 %975
        %977 = vrot.lane.b32.xlu0 %v382, 32
        %v978 = vpop.permute.xlu0 %977
        %979 = vrot.lane.b32.xlu0 %v383, 32
        %v980 = vpop.permute.xlu0 %979
        %981 = vrot.lane.b32.xlu0 %v384, 32
        %v982 = vpop.permute.xlu0 %981
        %983 = vrot.lane.b32.xlu0 %v385, 32
        %v984 = vpop.permute.xlu0 %983
        %985 = vrot.lane.b32.xlu0 %v386, 32
        %v986 = vpop.permute.xlu0 %985
        %987 = vrot.lane.b32.xlu0 %v387, 32
        %v988 = vpop.permute.xlu0 %987
        %989 = vrot.lane.b32.xlu0 %v388, 32
        %v990 = vpop.permute.xlu0 %989
        %991 = vrot.lane.b32.xlu0 %v389, 32
        %v992 = vpop.permute.xlu0 %991
        %993 = vrot.lane.b32.xlu0 %v390, 32
        %v994 = vpop.permute.xlu0 %993
        %995 = vrot.lane.b32.xlu0 %v391, 32
        %v996 = vpop.permute.xlu0 %995
        %997 = vrot.lane.b32.xlu0 %v392, 32
        %v998 = vpop.permute.xlu0 %997
        %999 = vrot.lane.b32.xlu0 %v393, 32
        %v1000 = vpop.permute.xlu0 %999
        %1001 = vrot.lane.b32.xlu0 %v394, 32
        %v1002 = vpop.permute.xlu0 %1001
        %1003 = vrot.lane.b32.xlu0 %v395, 32
        %v1004 = vpop.permute.xlu0 %1003
        %1069 = vrot.lane.b32.xlu0 %v396, 40
        %v1070 = vpop.permute.xlu0 %1069
        %1071 = vrot.lane.b32.xlu0 %v397, 40
        %v1072 = vpop.permute.xlu0 %1071
        %1073 = vrot.lane.b32.xlu0 %v398, 40
        %v1074 = vpop.permute.xlu0 %1073
        %1075 = vrot.lane.b32.xlu0 %v399, 40
        %v1076 = vpop.permute.xlu0 %1075
        %1077 = vrot.lane.b32.xlu0 %v400, 40
        %v1078 = vpop.permute.xlu0 %1077
        %1079 = vrot.lane.b32.xlu0 %v401, 40
        %v1080 = vpop.permute.xlu0 %1079
        %1081 = vrot.lane.b32.xlu0 %v402, 40
        %v1082 = vpop.permute.xlu0 %1081
        %1083 = vrot.lane.b32.xlu0 %v403, 40
        %v1084 = vpop.permute.xlu0 %1083
        %1085 = vrot.lane.b32.xlu0 %v404, 40
        %v1086 = vpop.permute.xlu0 %1085
        %1087 = vrot.lane.b32.xlu0 %v405, 40
        %v1088 = vpop.permute.xlu0 %1087
        %1089 = vrot.lane.b32.xlu0 %v406, 40
        %v1090 = vpop.permute.xlu0 %1089
        %1091 = vrot.lane.b32.xlu0 %v407, 40
        %v1092 = vpop.permute.xlu0 %1091
        %1093 = vrot.lane.b32.xlu0 %v408, 40
        %v1094 = vpop.permute.xlu0 %1093
        %1095 = vrot.lane.b32.xlu0 %v409, 40
        %v1096 = vpop.permute.xlu0 %1095
        %1097 = vrot.lane.b32.xlu0 %v410, 40
        %v1098 = vpop.permute.xlu0 %1097
        %1099 = vrot.lane.b32.xlu0 %v411, 40
        %v1100 = vpop.permute.xlu0 %1099
        %1101 = vrot.lane.b32.xlu0 %v412, 40
        %v1102 = vpop.permute.xlu0 %1101
        %1103 = vrot.lane.b32.xlu0 %v413, 40
        %v1104 = vpop.permute.xlu0 %1103
        %1105 = vrot.lane.b32.xlu0 %v414, 40
        %v1106 = vpop.permute.xlu0 %1105
        %1107 = vrot.lane.b32.xlu0 %v415, 40
        %v1108 = vpop.permute.xlu0 %1107
        %1109 = vrot.lane.b32.xlu0 %v416, 40
        %v1110 = vpop.permute.xlu0 %1109
        %1111 = vrot.lane.b32.xlu0 %v417, 40
        %v1112 = vpop.permute.xlu0 %1111
        %1113 = vrot.lane.b32.xlu0 %v418, 40
        %v1114 = vpop.permute.xlu0 %1113
        %1115 = vrot.lane.b32.xlu0 %v419, 40
        %v1116 = vpop.permute.xlu0 %1115
        %1117 = vrot.lane.b32.xlu0 %v420, 40
        %v1118 = vpop.permute.xlu0 %1117
        %1119 = vrot.lane.b32.xlu0 %v421, 40
        %v1120 = vpop.permute.xlu0 %1119
        %1121 = vrot.lane.b32.xlu0 %v422, 40
        %v1122 = vpop.permute.xlu0 %1121
        %1123 = vrot.lane.b32.xlu0 %v423, 40
        %v1124 = vpop.permute.xlu0 %1123
        %1125 = vrot.lane.b32.xlu0 %v424, 40
        %v1126 = vpop.permute.xlu0 %1125
        %1127 = vrot.lane.b32.xlu0 %v425, 40
        %v1128 = vpop.permute.xlu0 %1127
        %1129 = vrot.lane.b32.xlu0 %v426, 40
        %v1130 = vpop.permute.xlu0 %1129
        %1131 = vrot.lane.b32.xlu0 %v427, 40
        %v1132 = vpop.permute.xlu0 %1131
        %1197 = vrot.lane.b32.xlu0 %v429, 48
        %v1198 = vpop.permute.xlu0 %1197
        %1199 = vrot.lane.b32.xlu0 %v430, 48
        %v1200 = vpop.permute.xlu0 %1199
        %1201 = vrot.lane.b32.xlu0 %v431, 48
        %v1202 = vpop.permute.xlu0 %1201
        %1203 = vrot.lane.b32.xlu0 %v432, 48
        %v1204 = vpop.permute.xlu0 %1203
        %1205 = vrot.lane.b32.xlu0 %v433, 48
        %v1206 = vpop.permute.xlu0 %1205
        %1207 = vrot.lane.b32.xlu0 %v434, 48
        %v1208 = vpop.permute.xlu0 %1207
        %1209 = vrot.lane.b32.xlu0 %v435, 48
        %v1210 = vpop.permute.xlu0 %1209
        %1211 = vrot.lane.b32.xlu0 %v436, 48
        %v1212 = vpop.permute.xlu0 %1211
        %1213 = vrot.lane.b32.xlu0 %v437, 48
        %v1214 = vpop.permute.xlu0 %1213
        %1215 = vrot.lane.b32.xlu0 %v438, 48
        %v1216 = vpop.permute.xlu0 %1215
        %1217 = vrot.lane.b32.xlu0 %v439, 48
        %v1218 = vpop.permute.xlu0 %1217
        %1219 = vrot.lane.b32.xlu0 %v440, 48
        %v1220 = vpop.permute.xlu0 %1219
        %1221 = vrot.lane.b32.xlu0 %v441, 48
        %v1222 = vpop.permute.xlu0 %1221
        %1223 = vrot.lane.b32.xlu0 %v442, 48
        %v1224 = vpop.permute.xlu0 %1223
        %1225 = vrot.lane.b32.xlu0 %v443, 48
        %v1226 = vpop.permute.xlu0 %1225
        %1227 = vrot.lane.b32.xlu0 %v444, 48
        %v1228 = vpop.permute.xlu0 %1227
        %1229 = vrot.lane.b32.xlu0 %v445, 48
        %v1230 = vpop.permute.xlu0 %1229
        %1231 = vrot.lane.b32.xlu0 %v446, 48
        %v1232 = vpop.permute.xlu0 %1231
        %1233 = vrot.lane.b32.xlu0 %v447, 48
        %v1234 = vpop.permute.xlu0 %1233
        %1235 = vrot.lane.b32.xlu0 %v448, 48
        %v1236 = vpop.permute.xlu0 %1235
        %1237 = vrot.lane.b32.xlu0 %v449, 48
        %v1238 = vpop.permute.xlu0 %1237
        %1239 = vrot.lane.b32.xlu0 %v450, 48
        %v1240 = vpop.permute.xlu0 %1239
        %1241 = vrot.lane.b32.xlu0 %v451, 48
        %v1242 = vpop.permute.xlu0 %1241
        %1243 = vrot.lane.b32.xlu0 %v452, 48
        %v1244 = vpop.permute.xlu0 %1243
        %1245 = vrot.lane.b32.xlu0 %v453, 48
        %v1246 = vpop.permute.xlu0 %1245
        %1247 = vrot.lane.b32.xlu0 %v454, 48
        %v1248 = vpop.permute.xlu0 %1247
        %1249 = vrot.lane.b32.xlu0 %v455, 48
        %v1250 = vpop.permute.xlu0 %1249
        %1251 = vrot.lane.b32.xlu0 %v456, 48
        %v1252 = vpop.permute.xlu0 %1251
        %1253 = vrot.lane.b32.xlu0 %v457, 48
        %v1254 = vpop.permute.xlu0 %1253
        %1255 = vrot.lane.b32.xlu0 %v458, 48
        %v1256 = vpop.permute.xlu0 %1255
        %1257 = vrot.lane.b32.xlu0 %v459, 48
        %v1258 = vpop.permute.xlu0 %1257
        %1259 = vrot.lane.b32.xlu0 %v460, 48
        %v1260 = vpop.permute.xlu0 %1259
        %1325 = vrot.lane.b32.xlu0 %v461, 56
        %v1326 = vpop.permute.xlu0 %1325
        %1327 = vrot.lane.b32.xlu0 %v462, 56
        %v1328 = vpop.permute.xlu0 %1327
        %1329 = vrot.lane.b32.xlu0 %v463, 56
        %v1330 = vpop.permute.xlu0 %1329
        %1331 = vrot.lane.b32.xlu0 %v464, 56
        %v1332 = vpop.permute.xlu0 %1331
        %1333 = vrot.lane.b32.xlu0 %v465, 56
        %v1334 = vpop.permute.xlu0 %1333
        %1335 = vrot.lane.b32.xlu0 %v466, 56
        %v1336 = vpop.permute.xlu0 %1335
        %1337 = vrot.lane.b32.xlu0 %v467, 56
        %v1338 = vpop.permute.xlu0 %1337
        %1339 = vrot.lane.b32.xlu0 %v468, 56
        %v1340 = vpop.permute.xlu0 %1339
        %1341 = vrot.lane.b32.xlu0 %v469, 56
        %v1342 = vpop.permute.xlu0 %1341
        %1343 = vrot.lane.b32.xlu0 %v470, 56
        %v1344 = vpop.permute.xlu0 %1343
        %1345 = vrot.lane.b32.xlu0 %v471, 56
        %v1346 = vpop.permute.xlu0 %1345
        %1347 = vrot.lane.b32.xlu0 %v472, 56
        %v1348 = vpop.permute.xlu0 %1347
        %1349 = vrot.lane.b32.xlu0 %v473, 56
        %v1350 = vpop.permute.xlu0 %1349
        %1351 = vrot.lane.b32.xlu0 %v474, 56
        %v1352 = vpop.permute.xlu0 %1351
        %1353 = vrot.lane.b32.xlu0 %v475, 56
        %v1354 = vpop.permute.xlu0 %1353
        %1355 = vrot.lane.b32.xlu0 %v476, 56
        %v1356 = vpop.permute.xlu0 %1355
        %1357 = vrot.lane.b32.xlu0 %v477, 56
        %v1358 = vpop.permute.xlu0 %1357
        %1359 = vrot.lane.b32.xlu0 %v478, 56
        %v1360 = vpop.permute.xlu0 %1359
        %1361 = vrot.lane.b32.xlu0 %v479, 56
        %v1362 = vpop.permute.xlu0 %1361
        %1363 = vrot.lane.b32.xlu0 %v480, 56
        %v1364 = vpop.permute.xlu0 %1363
        %1365 = vrot.lane.b32.xlu0 %v481, 56
        %v1366 = vpop.permute.xlu0 %1365
        %1367 = vrot.lane.b32.xlu0 %v482, 56
        %v1368 = vpop.permute.xlu0 %1367
        %1369 = vrot.lane.b32.xlu0 %v483, 56
        %v1370 = vpop.permute.xlu0 %1369
        %1371 = vrot.lane.b32.xlu0 %v484, 56
        %v1372 = vpop.permute.xlu0 %1371
        %1373 = vrot.lane.b32.xlu0 %v485, 56
        %v1374 = vpop.permute.xlu0 %1373
        %1375 = vrot.lane.b32.xlu0 %v486, 56
        %v1376 = vpop.permute.xlu0 %1375
        %1377 = vrot.lane.b32.xlu0 %v487, 56
        %v1378 = vpop.permute.xlu0 %1377
        %1379 = vrot.lane.b32.xlu0 %v488, 56
        %v1380 = vpop.permute.xlu0 %1379
        %1381 = vrot.lane.b32.xlu0 %v489, 56
        %v1382 = vpop.permute.xlu0 %1381
        %1383 = vrot.lane.b32.xlu0 %v490, 56
        %v1384 = vpop.permute.xlu0 %1383
        %1385 = vrot.lane.b32.xlu0 %v491, 56
        %v1386 = vpop.permute.xlu0 %1385
        %1387 = vrot.lane.b32.xlu0 %v492, 56
        %v1388 = vpop.permute.xlu0 %1387
        %1453 = vrot.lane.b32.xlu0 %v493, 64
        %v1454 = vpop.permute.xlu0 %1453
        %1455 = vrot.lane.b32.xlu0 %v494, 64
        %v1456 = vpop.permute.xlu0 %1455
        %1457 = vrot.lane.b32.xlu0 %v495, 64
        %v1458 = vpop.permute.xlu0 %1457
        %1459 = vrot.lane.b32.xlu0 %v496, 64
        %v1460 = vpop.permute.xlu0 %1459
        %1461 = vrot.lane.b32.xlu0 %v497, 64
        %v1462 = vpop.permute.xlu0 %1461
        %1463 = vrot.lane.b32.xlu0 %v498, 64
        %v1464 = vpop.permute.xlu0 %1463
        %1465 = vrot.lane.b32.xlu0 %v499, 64
        %v1466 = vpop.permute.xlu0 %1465
        %1467 = vrot.lane.b32.xlu0 %v500, 64
        %v1468 = vpop.permute.xlu0 %1467
        %1469 = vrot.lane.b32.xlu0 %v501, 64
        %v1470 = vpop.permute.xlu0 %1469
        %1471 = vrot.lane.b32.xlu0 %v502, 64
        %v1472 = vpop.permute.xlu0 %1471
        %1473 = vrot.lane.b32.xlu0 %v503, 64
        %v1474 = vpop.permute.xlu0 %1473
        %1475 = vrot.lane.b32.xlu0 %v504, 64
        %v1476 = vpop.permute.xlu0 %1475
        %1477 = vrot.lane.b32.xlu0 %v505, 64
        %v1478 = vpop.permute.xlu0 %1477
        %1479 = vrot.lane.b32.xlu0 %v506, 64
        %v1480 = vpop.permute.xlu0 %1479
        %1481 = vrot.lane.b32.xlu0 %v507, 64
        %v1482 = vpop.permute.xlu0 %1481
        %1483 = vrot.lane.b32.xlu0 %v508, 64
        %v1484 = vpop.permute.xlu0 %1483
        %1485 = vrot.lane.b32.xlu0 %v509, 64
        %v1486 = vpop.permute.xlu0 %1485
        %1487 = vrot.lane.b32.xlu0 %v510, 64
        %v1488 = vpop.permute.xlu0 %1487
        %1489 = vrot.lane.b32.xlu0 %v511, 64
        %v1490 = vpop.permute.xlu0 %1489
        %1491 = vrot.lane.b32.xlu0 %v512, 64
        %v1492 = vpop.permute.xlu0 %1491
        %1493 = vrot.lane.b32.xlu0 %v513, 64
        %v1494 = vpop.permute.xlu0 %1493
        %1495 = vrot.lane.b32.xlu0 %v514, 64
        %v1496 = vpop.permute.xlu0 %1495
        %1497 = vrot.lane.b32.xlu0 %v515, 64
        %v1498 = vpop.permute.xlu0 %1497
        %1499 = vrot.lane.b32.xlu0 %v516, 64
        %v1500 = vpop.permute.xlu0 %1499
        %1501 = vrot.lane.b32.xlu0 %v517, 64
        %v1502 = vpop.permute.xlu0 %1501
        %1503 = vrot.lane.b32.xlu0 %v518, 64
        %v1504 = vpop.permute.xlu0 %1503
        %1505 = vrot.lane.b32.xlu0 %v519, 64
        %v1506 = vpop.permute.xlu0 %1505
        %1507 = vrot.lane.b32.xlu0 %v520, 64
        %v1508 = vpop.permute.xlu0 %1507
        %1509 = vrot.lane.b32.xlu0 %v521, 64
        %v1510 = vpop.permute.xlu0 %1509
        %1511 = vrot.lane.b32.xlu0 %v522, 64
        %v1512 = vpop.permute.xlu0 %1511
        %1513 = vrot.lane.b32.xlu0 %v523, 64
        %v1514 = vpop.permute.xlu0 %1513
        %1515 = vrot.lane.b32.xlu0 %v524, 64
        %v1516 = vpop.permute.xlu0 %1515
        %vm1549 = vcmask 64512
        %v1550 = vsel %vm1549, %v235, %v558
        %v1551 = vsel %vm1549, %v236, %v560
        %v1552 = vsel %vm1549, %v237, %v562
        %v1553 = vsel %vm1549, %v238, %v564
        %v1554 = vsel %vm1549, %v239, %v566
        %v1555 = vsel %vm1549, %v240, %v568
        %v1556 = vsel %vm1549, %v241, %v570
        %v1557 = vsel %vm1549, %v242, %v572
        %v1558 = vsel %vm1549, %v243, %v574
        %v1559 = vsel %vm1549, %v244, %v576
        %v1560 = vsel %vm1549, %v245, %v578
        %v1561 = vsel %vm1549, %v246, %v580
        %v1562 = vsel %vm1549, %v247, %v582
        %v1563 = vsel %vm1549, %v248, %v584
        %v1564 = vsel %vm1549, %v249, %v586
        %v1565 = vsel %vm1549, %v250, %v588
        %v1566 = vsel %vm1549, %v251, %v590
        %v1567 = vsel %vm1549, %v252, %v592
        %v1568 = vsel %vm1549, %v253, %v594
        %v1569 = vsel %vm1549, %v254, %v596
        %v1570 = vsel %vm1549, %v255, %v598
        %v1571 = vsel %vm1549, %v256, %v600
        %v1572 = vsel %vm1549, %v257, %v602
        %v1573 = vsel %vm1549, %v258, %v604
        %v1574 = vsel %vm1549, %v259, %v606
        %v1575 = vsel %vm1549, %v260, %v608
        %v1576 = vsel %vm1549, %v261, %v610
        %v1577 = vsel %vm1549, %v262, %v612
        %v1578 = vsel %vm1549, %v263, %v614
        %v1579 = vsel %vm1549, %v264, %v616
        %v1580 = vsel %vm1549, %v265, %v618
        %v1581 = vsel %vm1549, %v266, %v620
        %vm1582 = vcmask 130048
        %v1583 = vsel %vm1582, %v1550, %v686
        %v1584 = vsel %vm1582, %v1551, %v688
        %v1585 = vsel %vm1582, %v1552, %v690
        %v1586 = vsel %vm1582, %v1553, %v692
        %v1587 = vsel %vm1582, %v1554, %v694
        %v1588 = vsel %vm1582, %v1555, %v696
        %v1589 = vsel %vm1582, %v1556, %v698
        %v1590 = vsel %vm1582, %v1557, %v700
        %v1591 = vsel %vm1582, %v1558, %v702
        %v1592 = vsel %vm1582, %v1559, %v704
        %v1593 = vsel %vm1582, %v1560, %v706
        %v1594 = vsel %vm1582, %v1561, %v708
        %v1595 = vsel %vm1582, %v1562, %v710
        %v1596 = vsel %vm1582, %v1563, %v712
        %v1597 = vsel %vm1582, %v1564, %v714
        %v1598 = vsel %vm1582, %v1565, %v716
        %v1599 = vsel %vm1582, %v1566, %v718
        %v1600 = vsel %vm1582, %v1567, %v720
        %v1601 = vsel %vm1582, %v1568, %v722
        %v1602 = vsel %vm1582, %v1569, %v724
        %v1603 = vsel %vm1582, %v1570, %v726
        %v1604 = vsel %vm1582, %v1571, %v728
        %v1605 = vsel %vm1582, %v1572, %v730
        %v1606 = vsel %vm1582, %v1573, %v732
        %v1607 = vsel %vm1582, %v1574, %v734
        %v1608 = vsel %vm1582, %v1575, %v736
        %v1609 = vsel %vm1582, %v1576, %v738
        %v1610 = vsel %vm1582, %v1577, %v740
        %v1611 = vsel %vm1582, %v1578, %v742
        %v1612 = vsel %vm1582, %v1579, %v744
        %v1613 = vsel %vm1582, %v1580, %v746
        %v1614 = vsel %vm1582, %v1581, %v748
        %vm1615 = vcmask 195584
        %v1616 = vsel %vm1615, %v1583, %v814
        %v1617 = vsel %vm1615, %v1584, %v816
        %v1618 = vsel %vm1615, %v1585, %v818
        %v1619 = vsel %vm1615, %v1586, %v820
        %v1620 = vsel %vm1615, %v1587, %v822
        %v1621 = vsel %vm1615, %v1588, %v824
        %v1622 = vsel %vm1615, %v1589, %v826
        %v1623 = vsel %vm1615, %v1590, %v828
        %v1624 = vsel %vm1615, %v1591, %v830
        %v1625 = vsel %vm1615, %v1592, %v832
        %v1626 = vsel %vm1615, %v1593, %v834
        %v1627 = vsel %vm1615, %v1594, %v836
        %v1628 = vsel %vm1615, %v1595, %v838
        %v1629 = vsel %vm1615, %v1596, %v840
        %v1630 = vsel %vm1615, %v1597, %v842
        %v1631 = vsel %vm1615, %v1598, %v844
        %v1632 = vsel %vm1615, %v1599, %v846
        %v1633 = vsel %vm1615, %v1600, %v848
        %v1634 = vsel %vm1615, %v1601, %v850
        %v1635 = vsel %vm1615, %v1602, %v852
        %v1636 = vsel %vm1615, %v1603, %v854
        %v1637 = vsel %vm1615, %v1604, %v856
        %v1638 = vsel %vm1615, %v1605, %v858
        %v1639 = vsel %vm1615, %v1606, %v860
        %v1640 = vsel %vm1615, %v1607, %v862
        %v1641 = vsel %vm1615, %v1608, %v864
        %v1642 = vsel %vm1615, %v1609, %v866
        %v1643 = vsel %vm1615, %v1610, %v868
        %v1644 = vsel %vm1615, %v1611, %v870
        %v1645 = vsel %vm1615, %v1612, %v872
        %v1646 = vsel %vm1615, %v1613, %v874
        %v1647 = vsel %vm1615, %v1614, %v876
        %vm1648 = vcmask 261120
        %v1649 = vsel %vm1648, %v1616, %v942
        %v1650 = vsel %vm1648, %v1617, %v944
        %v1651 = vsel %vm1648, %v1618, %v946
        %v1652 = vsel %vm1648, %v1619, %v948
        %v1653 = vsel %vm1648, %v1620, %v950
        %v1654 = vsel %vm1648, %v1621, %v952
        %v1655 = vsel %vm1648, %v1622, %v954
        %v1656 = vsel %vm1648, %v1623, %v956
        %v1657 = vsel %vm1648, %v1624, %v958
        %v1658 = vsel %vm1648, %v1625, %v960
        %v1659 = vsel %vm1648, %v1626, %v962
        %v1660 = vsel %vm1648, %v1627, %v964
        %v1661 = vsel %vm1648, %v1628, %v966
        %v1662 = vsel %vm1648, %v1629, %v968
        %v1663 = vsel %vm1648, %v1630, %v970
        %v1664 = vsel %vm1648, %v1631, %v972
        %v1665 = vsel %vm1648, %v1632, %v974
        %v1666 = vsel %vm1648, %v1633, %v976
        %v1667 = vsel %vm1648, %v1634, %v978
        %v1668 = vsel %vm1648, %v1635, %v980
        %v1669 = vsel %vm1648, %v1636, %v982
        %v1670 = vsel %vm1648, %v1637, %v984
        %v1671 = vsel %vm1648, %v1638, %v986
        %v1672 = vsel %vm1648, %v1639, %v988
        %v1673 = vsel %vm1648, %v1640, %v990
        %v1674 = vsel %vm1648, %v1641, %v992
        %v1675 = vsel %vm1648, %v1642, %v994
        %v1676 = vsel %vm1648, %v1643, %v996
        %v1677 = vsel %vm1648, %v1644, %v998
        %v1678 = vsel %vm1648, %v1645, %v1000
        %v1679 = vsel %vm1648, %v1646, %v1002
        %v1680 = vsel %vm1648, %v1647, %v1004
        %vm1681 = vcmask 326656
        %v1682 = vsel %vm1681, %v1649, %v1070
        %v1683 = vsel %vm1681, %v1650, %v1072
        %v1684 = vsel %vm1681, %v1651, %v1074
        %v1685 = vsel %vm1681, %v1652, %v1076
        %v1686 = vsel %vm1681, %v1653, %v1078
        %v1687 = vsel %vm1681, %v1654, %v1080
        %v1688 = vsel %vm1681, %v1655, %v1082
        %v1689 = vsel %vm1681, %v1656, %v1084
        %v1690 = vsel %vm1681, %v1657, %v1086
        %v1691 = vsel %vm1681, %v1658, %v1088
        %v1692 = vsel %vm1681, %v1659, %v1090
        %v1693 = vsel %vm1681, %v1660, %v1092
        %v1694 = vsel %vm1681, %v1661, %v1094
        %v1695 = vsel %vm1681, %v1662, %v1096
        %v1696 = vsel %vm1681, %v1663, %v1098
        %v1697 = vsel %vm1681, %v1664, %v1100
        %v1698 = vsel %vm1681, %v1665, %v1102
        %v1699 = vsel %vm1681, %v1666, %v1104
        %v1700 = vsel %vm1681, %v1667, %v1106
        %v1701 = vsel %vm1681, %v1668, %v1108
        %v1702 = vsel %vm1681, %v1669, %v1110
        %v1703 = vsel %vm1681, %v1670, %v1112
        %v1704 = vsel %vm1681, %v1671, %v1114
        %v1705 = vsel %vm1681, %v1672, %v1116
        %v1706 = vsel %vm1681, %v1673, %v1118
        %v1707 = vsel %vm1681, %v1674, %v1120
        %v1708 = vsel %vm1681, %v1675, %v1122
        %v1709 = vsel %vm1681, %v1676, %v1124
        %v1710 = vsel %vm1681, %v1677, %v1126
        %v1711 = vsel %vm1681, %v1678, %v1128
        %v1712 = vsel %vm1681, %v1679, %v1130
        %v1713 = vsel %vm1681, %v1680, %v1132
        %vm1714 = vcmask 392192
        %v1715 = vsel %vm1714, %v1682, %v1198
        %v1716 = vsel %vm1714, %v1683, %v1200
        %v1717 = vsel %vm1714, %v1684, %v1202
        %v1718 = vsel %vm1714, %v1685, %v1204
        %v1719 = vsel %vm1714, %v1686, %v1206
        %v1720 = vsel %vm1714, %v1687, %v1208
        %v1721 = vsel %vm1714, %v1688, %v1210
        %v1722 = vsel %vm1714, %v1689, %v1212
        %v1723 = vsel %vm1714, %v1690, %v1214
        %v1724 = vsel %vm1714, %v1691, %v1216
        %v1725 = vsel %vm1714, %v1692, %v1218
        %v1726 = vsel %vm1714, %v1693, %v1220
        %v1727 = vsel %vm1714, %v1694, %v1222
        %v1728 = vsel %vm1714, %v1695, %v1224
        %v1729 = vsel %vm1714, %v1696, %v1226
        %v1730 = vsel %vm1714, %v1697, %v1228
        %v1731 = vsel %vm1714, %v1698, %v1230
        %v1732 = vsel %vm1714, %v1699, %v1232
        %v1733 = vsel %vm1714, %v1700, %v1234
        %v1734 = vsel %vm1714, %v1701, %v1236
        %v1735 = vsel %vm1714, %v1702, %v1238
        %v1736 = vsel %vm1714, %v1703, %v1240
        %v1737 = vsel %vm1714, %v1704, %v1242
        %v1738 = vsel %vm1714, %v1705, %v1244
        %v1739 = vsel %vm1714, %v1706, %v1246
        %v1740 = vsel %vm1714, %v1707, %v1248
        %v1741 = vsel %vm1714, %v1708, %v1250
        %v1742 = vsel %vm1714, %v1709, %v1252
        %v1743 = vsel %vm1714, %v1710, %v1254
        %v1744 = vsel %vm1714, %v1711, %v1256
        %v1745 = vsel %vm1714, %v1712, %v1258
        %v1746 = vsel %vm1714, %v1713, %v1260
        %vm1747 = vcmask 457728
        %v1748 = vsel %vm1747, %v1715, %v1326
        %v1749 = vsel %vm1747, %v1716, %v1328
        %v1750 = vsel %vm1747, %v1717, %v1330
        %v1751 = vsel %vm1747, %v1718, %v1332
        %v1752 = vsel %vm1747, %v1719, %v1334
        %v1753 = vsel %vm1747, %v1720, %v1336
        %v1754 = vsel %vm1747, %v1721, %v1338
        %v1755 = vsel %vm1747, %v1722, %v1340
        %v1756 = vsel %vm1747, %v1723, %v1342
        %v1757 = vsel %vm1747, %v1724, %v1344
        %v1758 = vsel %vm1747, %v1725, %v1346
        %v1759 = vsel %vm1747, %v1726, %v1348
        %v1760 = vsel %vm1747, %v1727, %v1350
        %v1761 = vsel %vm1747, %v1728, %v1352
        %v1762 = vsel %vm1747, %v1729, %v1354
        %v1763 = vsel %vm1747, %v1730, %v1356
        %v1764 = vsel %vm1747, %v1731, %v1358
        %v1765 = vsel %vm1747, %v1732, %v1360
        %v1766 = vsel %vm1747, %v1733, %v1362
        %v1767 = vsel %vm1747, %v1734, %v1364
        %v1768 = vsel %vm1747, %v1735, %v1366
        %v1769 = vsel %vm1747, %v1736, %v1368
        %v1770 = vsel %vm1747, %v1737, %v1370
        %v1771 = vsel %vm1747, %v1738, %v1372
        %v1772 = vsel %vm1747, %v1739, %v1374
        %v1773 = vsel %vm1747, %v1740, %v1376
        %v1774 = vsel %vm1747, %v1741, %v1378
        %v1775 = vsel %vm1747, %v1742, %v1380
        %v1776 = vsel %vm1747, %v1743, %v1382
        %v1777 = vsel %vm1747, %v1744, %v1384
        %v1778 = vsel %vm1747, %v1745, %v1386
        %v1779 = vsel %vm1747, %v1746, %v1388
        %vm1780 = vcmask 523264
        %v1781 = vsel %vm1780, %v1748, %v1454
        %v1782 = vsel %vm1780, %v1749, %v1456
        %v1783 = vsel %vm1780, %v1750, %v1458
        %v1784 = vsel %vm1780, %v1751, %v1460
        %v1785 = vsel %vm1780, %v1752, %v1462
        %v1786 = vsel %vm1780, %v1753, %v1464
        %v1787 = vsel %vm1780, %v1754, %v1466
        %v1788 = vsel %vm1780, %v1755, %v1468
        %v1789 = vsel %vm1780, %v1756, %v1470
        %v1790 = vsel %vm1780, %v1757, %v1472
        %v1791 = vsel %vm1780, %v1758, %v1474
        %v1792 = vsel %vm1780, %v1759, %v1476
        %v1793 = vsel %vm1780, %v1760, %v1478
        %v1794 = vsel %vm1780, %v1761, %v1480
        %v1795 = vsel %vm1780, %v1762, %v1482
        %v1796 = vsel %vm1780, %v1763, %v1484
        %v1797 = vsel %vm1780, %v1764, %v1486
        %v1798 = vsel %vm1780, %v1765, %v1488
        %v1799 = vsel %vm1780, %v1766, %v1490
        %v1800 = vsel %vm1780, %v1767, %v1492
        %v1801 = vsel %vm1780, %v1768, %v1494
        %v1802 = vsel %vm1780, %v1769, %v1496
        %v1803 = vsel %vm1780, %v1770, %v1498
        %v1804 = vsel %vm1780, %v1771, %v1500
        %v1805 = vsel %vm1780, %v1772, %v1502
        %v1806 = vsel %vm1780, %v1773, %v1504
        %v1807 = vsel %vm1780, %v1774, %v1506
        %v1808 = vsel %vm1780, %v1775, %v1508
        %v1809 = vsel %vm1780, %v1776, %v1510
        %v1810 = vsel %vm1780, %v1777, %v1512
        %v1811 = vsel %vm1780, %v1778, %v1514
        %v1812 = vsel %vm1780, %v1779, %v1516
        %vm1813 = vcmask 588800
        %v1814 = vsel %vm1813, %v1781, 0.0
        %v1815 = vsel %vm1813, %v1782, 0.0
        %v1816 = vsel %vm1813, %v1783, 0.0
        %v1817 = vsel %vm1813, %v1784, 0.0
        %v1818 = vsel %vm1813, %v1785, 0.0
        %v1819 = vsel %vm1813, %v1786, 0.0
        %v1820 = vsel %vm1813, %v1787, 0.0
        %v1821 = vsel %vm1813, %v1788, 0.0
        %v1822 = vsel %vm1813, %v1789, 0.0
        %v1823 = vsel %vm1813, %v1790, 0.0
        %v1824 = vsel %vm1813, %v1791, 0.0
        %v1825 = vsel %vm1813, %v1792, 0.0
        %v1826 = vsel %vm1813, %v1793, 0.0
        %v1827 = vsel %vm1813, %v1794, 0.0
        %v1828 = vsel %vm1813, %v1795, 0.0
        %v1829 = vsel %vm1813, %v1796, 0.0
        %v1830 = vsel %vm1813, %v1797, 0.0
        %v1831 = vsel %vm1813, %v1798, 0.0
        %v1832 = vsel %vm1813, %v1799, 0.0
        %v1833 = vsel %vm1813, %v1800, 0.0
        %v1834 = vsel %vm1813, %v1801, 0.0
        %v1835 = vsel %vm1813, %v1802, 0.0
        %v1836 = vsel %vm1813, %v1803, 0.0
        %v1837 = vsel %vm1813, %v1804, 0.0
        %v1838 = vsel %vm1813, %v1805, 0.0
        %v1839 = vsel %vm1813, %v1806, 0.0
        %v1840 = vsel %vm1813, %v1807, 0.0
        %v1841 = vsel %vm1813, %v1808, 0.0
        %v1842 = vsel %vm1813, %v1809, 0.0
        %v1843 = vsel %vm1813, %v1810, 0.0
        %v1844 = vsel %vm1813, %v1811, 0.0
        %v1845 = vsel %vm1813, %v1812, 0.0
        %1846 = vst [vmem:[#allocation2] sm:$0xff] %v1814
        %1847 = vst [vmem:[#allocation2 + $0x8] sm:$0xff] %v1815
        %1848 = vst [vmem:[#allocation2 + $0x10] sm:$0xff] %v1816
        %1849 = vst [vmem:[#allocation2 + $0x18] sm:$0xff] %v1817
        %1850 = vst [vmem:[#allocation2 + $0x20] sm:$0xff] %v1818
        %1851 = vst [vmem:[#allocation2 + $0x28] sm:$0xff] %v1819
        %1852 = vst [vmem:[#allocation2 + $0x30] sm:$0xff] %v1820
        %1853 = vst [vmem:[#allocation2 + $0x38] sm:$0xff] %v1821
        %1854 = vst [vmem:[#allocation2 + $0x40] sm:$0xff] %v1822
        %1855 = vst [vmem:[#allocation2 + $0x48] sm:$0xff] %v1823
        %1856 = vst [vmem:[#allocation2 + $0x50] sm:$0xff] %v1824
        %1857 = vst [vmem:[#allocation2 + $0x58] sm:$0xff] %v1825
        %1858 = vst [vmem:[#allocation2 + $0x60] sm:$0xff] %v1826
        %1859 = vst [vmem:[#allocation2 + $0x68] sm:$0xff] %v1827
        %1860 = vst [vmem:[#allocation2 + $0x70] sm:$0xff] %v1828
        %1861 = vst [vmem:[#allocation2 + $0x78] sm:$0xff] %v1829
        %1862 = vst [vmem:[#allocation2 + $0x80] sm:$0xff] %v1830
        %1863 = vst [vmem:[#allocation2 + $0x88] sm:$0xff] %v1831
        %1864 = vst [vmem:[#allocation2 + $0x90] sm:$0xff] %v1832
        %1865 = vst [vmem:[#allocation2 + $0x98] sm:$0xff] %v1833
        %1866 = vst [vmem:[#allocation2 + $0xa0] sm:$0xff] %v1834
        %1867 = vst [vmem:[#allocation2 + $0xa8] sm:$0xff] %v1835
        %1868 = vst [vmem:[#allocation2 + $0xb0] sm:$0xff] %v1836
        %1869 = vst [vmem:[#allocation2 + $0xb8] sm:$0xff] %v1837
        %1870 = vst [vmem:[#allocation2 + $0xc0] sm:$0xff] %v1838
        %1871 = vst [vmem:[#allocation2 + $0xc8] sm:$0xff] %v1839
        %1872 = vst [vmem:[#allocation2 + $0xd0] sm:$0xff] %v1840
        %1873 = vst [vmem:[#allocation2 + $0xd8] sm:$0xff] %v1841
        %1874 = vst [vmem:[#allocation2 + $0xe0] sm:$0xff] %v1842
        %1875 = vst [vmem:[#allocation2 + $0xe8] sm:$0xff] %v1843
        %1876 = vst [vmem:[#allocation2 + $0xf0] sm:$0xff] %v1844
        %1877 = vst [vmem:[#allocation2 + $0xf8] sm:$0xff] %v1845
        %v1878 = vld [vmem:[#allocation2] sm:$0xff]
        %v1879 = vld [vmem:[#allocation2 + $0x8] sm:$0xff]
        %v1880 = vld [vmem:[#allocation2 + $0x10] sm:$0xff]
        %v1881 = vld [vmem:[#allocation2 + $0x18] sm:$0xff]
        %v1882 = vld [vmem:[#allocation2 + $0x20] sm:$0xff]
        %v1883 = vld [vmem:[#allocation2 + $0x28] sm:$0xff]
        %v1884 = vld [vmem:[#allocation2 + $0x30] sm:$0xff]
        %v1885 = vld [vmem:[#allocation2 + $0x38] sm:$0xff]
        %v1886 = vld [vmem:[#allocation2 + $0x40] sm:$0xff]
        %v1887 = vld [vmem:[#allocation2 + $0x48] sm:$0xff]
        %v1888 = vld [vmem:[#allocation2 + $0x50] sm:$0xff]
        %v1889 = vld [vmem:[#allocation2 + $0x58] sm:$0xff]
        %v1890 = vld [vmem:[#allocation2 + $0x60] sm:$0xff]
        %v1891 = vld [vmem:[#allocation2 + $0x68] sm:$0xff]
        %v1892 = vld [vmem:[#allocation2 + $0x70] sm:$0xff]
        %v1893 = vld [vmem:[#allocation2 + $0x78] sm:$0xff]
        %v1894 = vld [vmem:[#allocation2 + $0x80] sm:$0xff]
        %v1895 = vld [vmem:[#allocation2 + $0x88] sm:$0xff]
        %v1896 = vld [vmem:[#allocation2 + $0x90] sm:$0xff]
        %v1897 = vld [vmem:[#allocation2 + $0x98] sm:$0xff]
        %v1898 = vld [vmem:[#allocation2 + $0xa0] sm:$0xff]
        %v1899 = vld [vmem:[#allocation2 + $0xa8] sm:$0xff]
        %v1900 = vld [vmem:[#allocation2 + $0xb0] sm:$0xff]
        %v1901 = vld [vmem:[#allocation2 + $0xb8] sm:$0xff]
        %v1902 = vld [vmem:[#allocation2 + $0xc0] sm:$0xff]
        %v1903 = vld [vmem:[#allocation2 + $0xc8] sm:$0xff]
        %v1904 = vld [vmem:[#allocation2 + $0xd0] sm:$0xff]
        %v1905 = vld [vmem:[#allocation2 + $0xd8] sm:$0xff]
        %v1906 = vld [vmem:[#allocation2 + $0xe0] sm:$0xff]
        %v1907 = vld [vmem:[#allocation2 + $0xe8] sm:$0xff]
        %v1908 = vld [vmem:[#allocation2 + $0xf0] sm:$0xff]
        %v1909 = vld [vmem:[#allocation2 + $0xf8] sm:$0xff]
        %v1910 = vld [vmem:[#allocation6] sm:$0xff]
        %v1911 = vld [vmem:[#allocation6 + $0x8] sm:$0xff]
        %v1912 = vld [vmem:[#allocation6 + $0x10] sm:$0xff]
        %v1913 = vld [vmem:[#allocation6 + $0x18] sm:$0xff]
        %v1914 = vld [vmem:[#allocation6 + $0x20] sm:$0xff]
        %v1915 = vld [vmem:[#allocation6 + $0x28] sm:$0xff]
        %v1916 = vld [vmem:[#allocation6 + $0x30] sm:$0xff]
        %v1917 = vld [vmem:[#allocation6 + $0x38] sm:$0xff]
        %v1918 = vld [vmem:[#allocation6 + $0x40] sm:$0xff]
        %v1919 = vld [vmem:[#allocation6 + $0x48] sm:$0xff]
        %v1920 = vld [vmem:[#allocation6 + $0x50] sm:$0xff]
        %v1921 = vld [vmem:[#allocation6 + $0x58] sm:$0xff]
        %v1922 = vld [vmem:[#allocation6 + $0x60] sm:$0xff]
        %v1923 = vld [vmem:[#allocation6 + $0x68] sm:$0xff]
        %v1924 = vld [vmem:[#allocation6 + $0x70] sm:$0xff]
        %v1925 = vld [vmem:[#allocation6 + $0x78] sm:$0xff]
        %v1926 = vld [vmem:[#allocation8] sm:$0x1]
        %v1928 = vlaneseq
        %v1929 = vshrl.u32 %v1928, 7
        %v1930 = vsub.s32 0, %v1929
        %v1931 = vrot.slane %v1926, %v1930
        %1933 = vmatprep.subr.mxu0 0.0
        %1934 = vmatpush1.msra.mxu0 %v1910
        %1935 = vmatprep.subr.mxu0 0.0
        %1936 = vmatpush1.msra.mxu0 %v1911
        %1937 = vmatprep.subr.mxu0 0.0
        %1938 = vmatpush1.msra.mxu0 %v1912
        %1939 = vmatprep.subr.mxu0 0.0
        %1940 = vmatpush1.msra.mxu0 %v1913
        %1941 = vmatprep.subr.mxu0 0.0
        %1942 = vmatpush1.msra.mxu0 %v1914
        %1943 = vmatprep.subr.mxu0 0.0
        %1944 = vmatpush1.msra.mxu0 %v1915
        %1945 = vmatprep.subr.mxu0 0.0
        %1946 = vmatpush1.msra.mxu0 %v1916
        %1947 = vmatprep.subr.mxu0 0.0
        %1948 = vmatpush1.msra.mxu0 %v1917
        %1949 = vmatprep.subr.mxu0 0.0
        %1950 = vmatpush1.msra.mxu0 %v1918
        %1951 = vmatprep.subr.mxu0 0.0
        %1952 = vmatpush1.msra.mxu0 %v1919
        %1953 = vmatprep.subr.mxu0 0.0
        %1954 = vmatpush1.msra.mxu0 %v1920
        %1955 = vmatprep.subr.mxu0 0.0
        %1956 = vmatpush1.msra.mxu0 %v1921
        %1957 = vmatprep.subr.mxu0 0.0
        %1958 = vmatpush1.msra.mxu0 %v1922
        %1959 = vmatprep.subr.mxu0 0.0
        %1960 = vmatpush1.msra.mxu0 %v1923
        %1961 = vmatprep.subr.mxu0 0.0
        %1962 = vmatpush1.msra.mxu0 %v1924
        %1963 = vmatprep.subr.mxu0 0.0
        %1964 = vmatpush1.msra.mxu0 %v1925
        %1965 = vmatprep.subr.mxu0 0.0
        %1966 = vmatpush1.msra.mxu0 0.0
        %1967 = vmatprep.subr.mxu0 0.0
        %1968 = vmatpush1.msra.mxu0 0.0
        %1969 = vmatprep.subr.mxu0 0.0
        %1970 = vmatpush1.msra.mxu0 0.0
        %1971 = vmatprep.subr.mxu0 0.0
        %1972 = vmatpush1.msra.mxu0 0.0
        %1973 = vmatprep.subr.mxu0 0.0
        %1974 = vmatpush1.msra.mxu0 0.0
        %1975 = vmatprep.subr.mxu0 0.0
        %1976 = vmatpush1.msra.mxu0 0.0
        %1977 = vmatprep.subr.mxu0 0.0
        %1978 = vmatpush1.msra.mxu0 0.0
        %1979 = vmatprep.subr.mxu0 0.0
        %1980 = vmatpush1.msra.mxu0 0.0
        %1981 = vmatprep.subr.mxu0 0.0
        %1982 = vmatpush1.msra.mxu0 0.0
        %1983 = vmatprep.subr.mxu0 0.0
        %1984 = vmatpush1.msra.mxu0 0.0
        %1985 = vmatprep.subr.mxu0 0.0
        %1986 = vmatpush1.msra.mxu0 0.0
        %1987 = vmatprep.subr.mxu0 0.0
        %1988 = vmatpush1.msra.mxu0 0.0
        %1989 = vmatprep.subr.mxu0 0.0
        %1990 = vmatpush1.msra.mxu0 0.0
        %1991 = vmatprep.subr.mxu0 0.0
        %1992 = vmatpush1.msra.mxu0 0.0
        %1993 = vmatprep.subr.mxu0 0.0
        %1994 = vmatpush1.msra.mxu0 0.0
        %1995 = vmatprep.subr.mxu0 0.0
        %1996 = vmatpush1.msra.mxu0 0.0
        %1997 = vmatprep.mubr.f32.mxu0 0.0
        %1998 = vmatmul.mubr.f32.gmra.mrb[0].mxu0 %v1878
        %v1999 = vpop.f32.mrb[0].mxu0
        %v2000 = vadd.f32 %v1931, %v1999
        %v2001 = vpop.f32.mrb[0].mxu0
        %2002 = vmatprep.mubr.f32.mxu0 0.0
        %2003 = vmatmul.mubr.f32.gmra.mrb[0].mxu0 %v1879
        %v2004 = vpop.f32.mrb[0].mxu0
        %v2005 = vadd.f32 %v1931, %v2004
        %v2006 = vpop.f32.mrb[0].mxu0
        %2007 = vmatprep.mubr.f32.mxu0 0.0
        %2008 = vmatmul.mubr.f32.gmra.mrb[0].mxu0 %v1880
        %v2009 = vpop.f32.mrb[0].mxu0
        %v2010 = vadd.f32 %v1931, %v2009
        %v2011 = vpop.f32.mrb[0].mxu0
        %2012 = vmatprep.mubr.f32.mxu0 0.0
        %2013 = vmatmul.mubr.f32.gmra.mrb[0].mxu0 %v1881
        %v2014 = vpop.f32.mrb[0].mxu0
        %v2015 = vadd.f32 %v1931, %v2014
        %v2016 = vpop.f32.mrb[0].mxu0
        %2017 = vmatprep.mubr.f32.mxu0 0.0
        %2018 = vmatmul.mubr.f32.gmra.mrb[0].mxu0 %v1882
        %v2019 = vpop.f32.mrb[0].mxu0
        %v2020 = vadd.f32 %v1931, %v2019
        %v2021 = vpop.f32.mrb[0].mxu0
        %2022 = vmatprep.mubr.f32.mxu0 0.0
        %2023 = vmatmul.mubr.f32.gmra.mrb[0].mxu0 %v1883
        %v2024 = vpop.f32.mrb[0].mxu0
        %v2025 = vadd.f32 %v1931, %v2024
        %v2026 = vpop.f32.mrb[0].mxu0
        %2027 = vmatprep.mubr.f32.mxu0 0.0
        %2028 = vmatmul.mubr.f32.gmra.mrb[0].mxu0 %v1884
        %v2029 = vpop.f32.mrb[0].mxu0
        %v2030 = vadd.f32 %v1931, %v2029
        %v2031 = vpop.f32.mrb[0].mxu0
        %2032 = vmatprep.mubr.f32.mxu0 0.0
        %2033 = vmatmul.mubr.f32.gmra.mrb[0].mxu0 %v1885
        %v2034 = vpop.f32.mrb[0].mxu0
        %v2035 = vadd.f32 %v1931, %v2034
        %v2036 = vpop.f32.mrb[0].mxu0
        %2037 = vmatprep.mubr.f32.mxu0 0.0
        %2038 = vmatmul.mubr.f32.gmra.mrb[0].mxu0 %v1886
        %v2039 = vpop.f32.mrb[0].mxu0
        %v2040 = vadd.f32 %v1931, %v2039
        %v2041 = vpop.f32.mrb[0].mxu0
        %2042 = vmatprep.mubr.f32.mxu0 0.0
        %2043 = vmatmul.mubr.f32.gmra.mrb[0].mxu0 %v1887
        %v2044 = vpop.f32.mrb[0].mxu0
        %v2045 = vadd.f32 %v1931, %v2044
        %v2046 = vpop.f32.mrb[0].mxu0
        %2047 = vmatprep.mubr.f32.mxu0 0.0
        %2048 = vmatmul.mubr.f32.gmra.mrb[0].mxu0 %v1888
        %v2049 = vpop.f32.mrb[0].mxu0
        %v2050 = vadd.f32 %v1931, %v2049
        %v2051 = vpop.f32.mrb[0].mxu0
        %2052 = vmatprep.mubr.f32.mxu0 0.0
        %2053 = vmatmul.mubr.f32.gmra.mrb[0].mxu0 %v1889
        %v2054 = vpop.f32.mrb[0].mxu0
        %v2055 = vadd.f32 %v1931, %v2054
        %v2056 = vpop.f32.mrb[0].mxu0
        %2057 = vmatprep.mubr.f32.mxu0 0.0
        %2058 = vmatmul.mubr.f32.gmra.mrb[0].mxu0 %v1890
        %v2059 = vpop.f32.mrb[0].mxu0
        %v2060 = vadd.f32 %v1931, %v2059
        %v2061 = vpop.f32.mrb[0].mxu0
        %2062 = vmatprep.mubr.f32.mxu0 0.0
        %2063 = vmatmul.mubr.f32.gmra.mrb[0].mxu0 %v1891
        %v2064 = vpop.f32.mrb[0].mxu0
        %v2065 = vadd.f32 %v1931, %v2064
        %v2066 = vpop.f32.mrb[0].mxu0
        %2067 = vmatprep.mubr.f32.mxu0 0.0
        %2068 = vmatmul.mubr.f32.gmra.mrb[0].mxu0 %v1892
        %v2069 = vpop.f32.mrb[0].mxu0
        %v2070 = vadd.f32 %v1931, %v2069
        %v2071 = vpop.f32.mrb[0].mxu0
        %2072 = vmatprep.mubr.f32.mxu0 0.0
        %2073 = vmatmul.mubr.f32.gmra.mrb[0].mxu0 %v1893
        %v2074 = vpop.f32.mrb[0].mxu0
        %v2075 = vadd.f32 %v1931, %v2074
        %v2076 = vpop.f32.mrb[0].mxu0
        %2077 = vmatprep.mubr.f32.mxu0 0.0
        %2078 = vmatmul.mubr.f32.gmra.mrb[0].mxu0 %v1894
        %v2079 = vpop.f32.mrb[0].mxu0
        %v2080 = vadd.f32 %v1931, %v2079
        %v2081 = vpop.f32.mrb[0].mxu0
        %2082 = vmatprep.mubr.f32.mxu0 0.0
        %2083 = vmatmul.mubr.f32.gmra.mrb[0].mxu0 %v1895
        %v2084 = vpop.f32.mrb[0].mxu0
        %v2085 = vadd.f32 %v1931, %v2084
        %v2086 = vpop.f32.mrb[0].mxu0
        %2087 = vmatprep.mubr.f32.mxu0 0.0
        %2088 = vmatmul.mubr.f32.gmra.mrb[0].mxu0 %v1896
        %v2089 = vpop.f32.mrb[0].mxu0
        %v2090 = vadd.f32 %v1931, %v2089
        %v2091 = vpop.f32.mrb[0].mxu0
        %2092 = vmatprep.mubr.f32.mxu0 0.0
        %2093 = vmatmul.mubr.f32.gmra.mrb[0].mxu0 %v1897
        %v2094 = vpop.f32.mrb[0].mxu0
        %v2095 = vadd.f32 %v1931, %v2094
        %v2096 = vpop.f32.mrb[0].mxu0
        %2097 = vmatprep.mubr.f32.mxu0 0.0
        %2098 = vmatmul.mubr.f32.gmra.mrb[0].mxu0 %v1898
        %v2099 = vpop.f32.mrb[0].mxu0
        %v2100 = vadd.f32 %v1931, %v2099
        %v2101 = vpop.f32.mrb[0].mxu0
        %2102 = vmatprep.mubr.f32.mxu0 0.0
        %2103 = vmatmul.mubr.f32.gmra.mrb[0].mxu0 %v1899
        %v2104 = vpop.f32.mrb[0].mxu0
        %v2105 = vadd.f32 %v1931, %v2104
        %v2106 = vpop.f32.mrb[0].mxu0
        %2107 = vmatprep.mubr.f32.mxu0 0.0
        %2108 = vmatmul.mubr.f32.gmra.mrb[0].mxu0 %v1900
        %v2109 = vpop.f32.mrb[0].mxu0
        %v2110 = vadd.f32 %v1931, %v2109
        %v2111 = vpop.f32.mrb[0].mxu0
        %2112 = vmatprep.mubr.f32.mxu0 0.0
        %2113 = vmatmul.mubr.f32.gmra.mrb[0].mxu0 %v1901
        %v2114 = vpop.f32.mrb[0].mxu0
        %v2115 = vadd.f32 %v1931, %v2114
        %v2116 = vpop.f32.mrb[0].mxu0
        %2117 = vmatprep.mubr.f32.mxu0 0.0
        %2118 = vmatmul.mubr.f32.gmra.mrb[0].mxu0 %v1902
        %v2119 = vpop.f32.mrb[0].mxu0
        %v2120 = vadd.f32 %v1931, %v2119
        %v2121 = vpop.f32.mrb[0].mxu0
        %2122 = vmatprep.mubr.f32.mxu0 0.0
        %2123 = vmatmul.mubr.f32.gmra.mrb[0].mxu0 %v1903
        %v2124 = vpop.f32.mrb[0].mxu0
        %v2125 = vadd.f32 %v1931, %v2124
        %v2126 = vpop.f32.mrb[0].mxu0
        %2127 = vmatprep.mubr.f32.mxu0 0.0
        %2128 = vmatmul.mubr.f32.gmra.mrb[0].mxu0 %v1904
        %v2129 = vpop.f32.mrb[0].mxu0
        %v2130 = vadd.f32 %v1931, %v2129
        %v2131 = vpop.f32.mrb[0].mxu0
        %2132 = vmatprep.mubr.f32.mxu0 0.0
        %2133 = vmatmul.mubr.f32.gmra.mrb[0].mxu0 %v1905
        %v2134 = vpop.f32.mrb[0].mxu0
        %v2135 = vadd.f32 %v1931, %v2134
        %v2136 = vpop.f32.mrb[0].mxu0
        %2137 = vmatprep.mubr.f32.mxu0 0.0
        %2138 = vmatmul.mubr.f32.gmra.mrb[0].mxu0 %v1906
        %v2139 = vpop.f32.mrb[0].mxu0
        %v2140 = vadd.f32 %v1931, %v2139
        %v2141 = vpop.f32.mrb[0].mxu0
        %2142 = vmatprep.mubr.f32.mxu0 0.0
        %2143 = vmatmul.mubr.f32.gmra.mrb[0].mxu0 %v1907
        %v2144 = vpop.f32.mrb[0].mxu0
        %v2145 = vadd.f32 %v1931, %v2144
        %v2146 = vpop.f32.mrb[0].mxu0
        %2147 = vmatprep.mubr.f32.mxu0 0.0
        %2148 = vmatmul.mubr.f32.gmra.mrb[0].mxu0 %v1908
        %v2149 = vpop.f32.mrb[0].mxu0
        %v2150 = vadd.f32 %v1931, %v2149
        %v2151 = vpop.f32.mrb[0].mxu0
        %2152 = vmatprep.mubr.f32.mxu0 0.0
        %2153 = vmatmul.mubr.f32.gmra.mrb[0].mxu0 %v1909
        %v2154 = vpop.f32.mrb[0].mxu0
        %v2155 = vadd.f32 %v1931, %v2154
        %v2156 = vpop.f32.mrb[0].mxu0
        %2157 = vdwg.mxu0
        %2158 = vst [vmem:[%s232] sm:$0xff] %v2000
        %2159 = vst [vmem:[%s232 + $0x8] sm:$0xff] %v2005
        %2160 = vst [vmem:[%s232 + $0x10] sm:$0xff] %v2010
        %2161 = vst [vmem:[%s232 + $0x18] sm:$0xff] %v2015
        %2162 = vst [vmem:[%s232 + $0x20] sm:$0xff] %v2020
        %2163 = vst [vmem:[%s232 + $0x28] sm:$0xff] %v2025
        %2164 = vst [vmem:[%s232 + $0x30] sm:$0xff] %v2030
        %2165 = vst [vmem:[%s232 + $0x38] sm:$0xff] %v2035
        %2166 = vst [vmem:[%s232 + $0x40] sm:$0xff] %v2040
        %2167 = vst [vmem:[%s232 + $0x48] sm:$0xff] %v2045
        %2168 = vst [vmem:[%s232 + $0x50] sm:$0xff] %v2050
        %2169 = vst [vmem:[%s232 + $0x58] sm:$0xff] %v2055
        %2170 = vst [vmem:[%s232 + $0x60] sm:$0xff] %v2060
        %2171 = vst [vmem:[%s232 + $0x68] sm:$0xff] %v2065
        %2172 = vst [vmem:[%s232 + $0x70] sm:$0xff] %v2070
        %2173 = vst [vmem:[%s232 + $0x78] sm:$0xff] %v2075
        %2174 = vst [vmem:[%s232 + $0x80] sm:$0xff] %v2080
        %2175 = vst [vmem:[%s232 + $0x88] sm:$0xff] %v2085
        %2176 = vst [vmem:[%s232 + $0x90] sm:$0xff] %v2090
        %2177 = vst [vmem:[%s232 + $0x98] sm:$0xff] %v2095
        %2178 = vst [vmem:[%s232 + $0xa0] sm:$0xff] %v2100
        %2179 = vst [vmem:[%s232 + $0xa8] sm:$0xff] %v2105
        %2180 = vst [vmem:[%s232 + $0xb0] sm:$0xff] %v2110
        %2181 = vst [vmem:[%s232 + $0xb8] sm:$0xff] %v2115
        %2182 = vst [vmem:[%s232 + $0xc0] sm:$0xff] %v2120
        %2183 = vst [vmem:[%s232 + $0xc8] sm:$0xff] %v2125
        %2184 = vst [vmem:[%s232 + $0xd0] sm:$0xff] %v2130
        %2185 = vst [vmem:[%s232 + $0xd8] sm:$0xff] %v2135
        %2186 = vst [vmem:[%s232 + $0xe0] sm:$0xff] %v2140
        %2187 = vst [vmem:[%s232 + $0xe8] sm:$0xff] %v2145
        %2188 = vst [vmem:[%s232 + $0xf0] sm:$0xff] %v2150
        %2189 = vst [vmem:[%s232 + $0xf8] sm:$0xff] %v2155
        %s2190 = sand.u32 %s113, 1
        %s2191 = scalar_lea.sflag [#allocation5], %s2190
        %s2192 = sand.u32 %s113, 1
        %s2193 = smul.addr %s2192, 256
        %s2194 = scalar_lea.vmem [#allocation9], %s2193
        // Predicated region
        $region45: #{tpu_custom_call.1} parent=31 // pred_check
          %p2195 = pneg %p123
        $region46: #{tpu_custom_call.1} parent=31 // pred_check_branch
          %2197 = sbr.rel (%p2195) target = $region48
        $region47: #{tpu_custom_call.1} parent=31 // pred_region
          %s2198 = sadd.s32 %s25, %s26
          %s2200 = ssub.s32 4096, 4096
          %2201 = vsyncadd %s2191, %s2200
          %s2202 = smul.addr %s2198, 32
          %s2203 = smul.addr %s2202, 128
          %s2204 = scalar_lea.hbm %s3, %s2203
          %s2205 = sshll.u32 %s2194, 4
          %s2206 = int_to_ptr.vmem [resolvable:$true] %s2205
          %2211 = dma.vmem_to_hbm [thread:$0]  %s2206, 4096, %s2204, %s2191, 128, 128, 8
        $region48: #{tpu_custom_call.1} parent=31 // pred_fallthru
          _
      $region32: #{tpu_custom_call.1} parent=5 // pred_fallthru
        _
      %p2212 = scmp.le.s32.totalorder 2, %s16
      // Predicated region
      $region49: #{tpu_custom_call.1} parent=5 // pred_check
        %p2213 = pneg %p2212
      $region50: #{tpu_custom_call.1} parent=5 // pred_check_branch
        %2215 = sbr.rel (%p2213) target = $region52
      $region51: #{tpu_custom_call.1} parent=5 // pred_region
        %s2216 = ssub.s32 %s16, 2
        // Predicated region
        $region53: #{tpu_custom_call.1} parent=51 // pred_check
          %p2217 = pneg %p129
        $region54: #{tpu_custom_call.1} parent=51 // pred_check_branch
          %2219 = sbr.rel (%p2217) target = $region56
        $region55: #{tpu_custom_call.1} parent=51 // pred_region
          %s2220 = sand.u32 %s114, 1
          %s2221 = scalar_lea.sflag [#allocation5], %s2220
          %s2222 = sand.u32 %s114, 1
          %s2223 = smul.addr %s2222, 256
          %s2224 = scalar_lea.vmem [#allocation9], %s2223
          %2225 = dma.done %s2221, 4096
        $region56: #{tpu_custom_call.1} parent=51 // pred_fallthru
          _
      $region52: #{tpu_custom_call.1} parent=5 // pred_fallthru
        _
    $region6: #{tpu_custom_call.1} parent=1 // loop_footer
      %s20 = sadd.s32 1, %s16
    $region7: #{tpu_custom_call.1} parent=1 // loop_footer_branch
      %15 = sbr.rel target = $region3
    $region8: #{tpu_custom_call.1} parent=1 // loop_exit
      _
    %2226 = vsyncpa [#allocation4], 1
    %s2227 = scalar_lea.sflag [#allocation4], 1
    %2228 = vsyncpa %s2227, 1
    %2229 = vsyncpa [#allocation7], 1
    %2230 = vsyncpa [#allocation5], 1
    %s2231 = scalar_lea.sflag [#allocation5], 1
    %2232 = vsyncpa %s2231, 1

</llo_original>
